<compile_context>
chip_gen: v7x
topology: tpu7x:2x2x1
jax: 0.10.0
libtpu: 0.0.40
codegen_flags: <defaults>
</compile_context>

<pallas_src>
import numpy as np

import jax
import jax.numpy as jnp
from jax.experimental import pallas as pl
from jax.experimental.pallas import tpu as pltpu  # noqa: F401  (TPU backend assumed)

LANE = 128


def _full_spec(shape):
    nd = len(shape)
    return pl.BlockSpec(shape, lambda: (0,) * nd)


# ----------------------------- fused forward kernel ------------------------- #

def _make_fused_kernel(layer_meta):
    """Build the fused forward kernel body.

    layer_meta: list of static per-layer dicts {'has_bn', 'ohw', 'act'}.
    Ref order: (x, [W, bias, (P, PT, gamma, beta)? per layer], out).
    """

    def kernel(*refs):
        x_ref, o_ref = refs[0], refs[-1]
        pos = 1
        y = x_ref[...]
        for meta in layer_meta:
            w_ref, b_ref = refs[pos], refs[pos + 1]
            pos += 2
            # Conv2d as a single dense matmul (bf16 inputs, f32 accumulate) + bias.
            y = jnp.dot(y.astype(w_ref.dtype), w_ref[...],
                        preferred_element_type=jnp.float32) + b_ref[...]
            if meta['has_bn']:
                p_ref, pt_ref, g_ref, bt_ref = refs[pos:pos + 4]
                pos += 4
                # Training-mode BatchNorm2d: biased batch stats over (N, OH, OW)
                # per channel, done with 0/1 pooling matmuls (everything stays 2D).
                inv_n = 1.0 / float(y.shape[0] * meta['ohw'])
                col_sum = jnp.sum(y, axis=0, keepdims=True)                    # (1, OHW*C)
                mean_c = jnp.dot(col_sum, p_ref[...],
                                 preferred_element_type=jnp.float32) * inv_n   # (1, C)
                mean_col = jnp.dot(mean_c, pt_ref[...],
                                   preferred_element_type=jnp.float32)         # (1, OHW*C)
                cent = y - mean_col
                var_c = jnp.dot(jnp.sum(cent * cent, axis=0, keepdims=True), p_ref[...],
                                preferred_element_type=jnp.float32) * inv_n    # (1, C)
                scale_c = g_ref[...] * jax.lax.rsqrt(var_c + 1e-5)              # (1, C)
                shift_c = bt_ref[...] - mean_c * scale_c
                y = (y * jnp.dot(scale_c, pt_ref[...], preferred_element_type=jnp.float32)
                     + jnp.dot(shift_c, pt_ref[...], preferred_element_type=jnp.float32))
            if meta['act'] == 'leaky':
                y = jnp.where(y >= 0.0, y, 0.2 * y)
            elif meta['act'] == 'sigmoid':
                e = jnp.exp(-jnp.abs(y))                       # EUP; overflow-safe sigmoid
                y = jnp.where(y >= 0.0, 1.0, e) / (1.0 + e)
        assert pos == len(refs) - 1  # trace-time sanity: consumed every operand
        o_ref[...] = y

    return kernel


# --------------------- one-time lowering of the conv stack ------------------ #

def _conv_to_dense(w, b, h_in, w_in, stride, pad, in_layout):
    """Lower Conv2d (PyTorch cross-correlation) to a dense per-sample matrix.

    Input rows:  'nchw' -> (c, h, w) flatten (raw NCHW image),
                 'hwc'  -> (h, w, c) flatten (internal activation layout).
    Output cols: (oh, ow, cout) flatten, cout minor.
    Returns (A[Hin*Win*Cin, OH*OW*Cout], bias_row[1, OH*OW*Cout], OH, OW).
    """
    w = np.asarray(w, np.float32)
    b = np.asarray(b, np.float32)
    cout, cin, kh, kw = w.shape
    oh_n = (h_in + 2 * pad - kh) // stride + 1
    ow_n = (w_in + 2 * pad - kw) // stride + 1
    a = np.zeros((h_in * w_in * cin, oh_n * ow_n * cout), np.float32)
    for oh in range(oh_n):
        for ow in range(ow_n):
            c0 = (oh * ow_n + ow) * cout
            for i in range(kh):
                hh = oh * stride + i - pad
                if hh < 0 or hh >= h_in:
                    continue  # zero padding -> contributes nothing
                for j in range(kw):
                    ww = ow * stride + j - pad
                    if ww < 0 or ww >= w_in:
                        continue
                    for ci in range(cin):
                        if in_layout == 'nchw':
                            r = (ci * h_in + hh) * w_in + ww
                        else:
                            r = (hh * w_in + ww) * cin + ci
                        a[r, c0:c0 + cout] = w[:, ci, i, j]
    bias_row = np.tile(b, oh_n * ow_n)[None, :].astype(np.float32)
    return a, bias_row, oh_n, ow_n


class Args:
    img_channel_num = 4
    # each entry = (out_channels, kernel_size, stride, padding) for nn.Conv2d(in, *x)
    cc_dim = 2
    dc_dim = 10
    layer_D = [(8, 4, 2, 1), (16, 4, 2, 1), (1 + cc_dim + dc_dim, 4, 1, 0)]
    use_batchnorm = True
    use_relu = True


def init_params(args, key):
    """Raw per-layer Conv2d / BatchNorm2d parameters (PyTorch layouts)."""
    params = []
    in_ch = args.img_channel_num
    for (out_ch, k, s, p) in args.layer_D:
        key, k1, k2 = jax.random.split(key, 3)
        w = jax.random.normal(k1, (out_ch, in_ch, k, k), jnp.float32) * 0.05
        b = jax.random.normal(k2, (out_ch,), jnp.float32) * 0.05
        params.append(dict(w=w, b=b, stride=s, pad=p,
                           gamma=jnp.ones((out_ch,), jnp.float32),
                           beta=jnp.zeros((out_ch,), jnp.float32)))
        in_ch = out_ch
    return params


def prepare_discriminator(args, params, in_h, in_w):
    """One-time lowering of all layers into fused-kernel operands (precomputed)."""
    last = len(args.layer_D) - 1
    tensors, meta = [], []
    h, w, layout = in_h, in_w, 'nchw'
    out_cols = out_c = out_oh = out_ow = None
    for i, prm in enumerate(params):
        a, bias_row, oh, ow = _conv_to_dense(prm['w'], prm['b'], h, w,
                                             prm['stride'], prm['pad'], layout)
        cout = int(prm['w'].shape[0])
        act = 'leaky' if (i < last and args.use_relu) else 'sigmoid'
        has_bn = (0 < i < last) and args.use_batchnorm
        if i == last:
            # Lane-dense final store: zero-pad output columns to a multiple of 128.
            dout = a.shape[1]
            dpad = max(LANE, -(-dout // LANE) * LANE)
            a = np.pad(a, ((0, 0), (0, dpad - dout)))
            bias_row = np.pad(bias_row, ((0, 0), (0, dpad - dout)))
            out_cols, out_c, out_oh, out_ow = dpad, cout, oh, ow
        tensors.append(jnp.asarray(a, jnp.bfloat16))          # bf16 weights, f32 accumulate
        tensors.append(jnp.asarray(bias_row, jnp.float32))
        if has_bn:
            dout = oh * ow * cout
            pool = (np.arange(dout)[:, None] % cout ==
                    np.arange(cout)[None, :]).astype(np.float32)   # (Dout, C) 0/1 pooling
            tensors.append(jnp.asarray(pool, jnp.float32))
            tensors.append(jnp.asarray(np.ascontiguousarray(pool.T), jnp.float32))
            tensors.append(jnp.asarray(np.asarray(prm['gamma'], np.float32)[None, :]))
            tensors.append(jnp.asarray(np.asarray(prm['beta'], np.float32)[None, :]))
        meta.append(dict(has_bn=has_bn, ohw=oh * ow, act=act))
        h, w, layout = oh, ow, 'hwc'
    return dict(tensors=tensors, meta=meta,
                out_cols=out_cols, out_c=out_c, out_oh=out_oh, out_ow=out_ow)


def discriminator_forward(args, prep, x_nchw):
    # TODO(synk): for production batch sizes, tile the batch (M) axis with a grid
    # (parallel semantics) and a two-pass BN instead of full-array blocks.
    n = x_nchw.shape[0]
    x2d = x_nchw.reshape(n, -1).astype(jnp.float32)   # NCHW flatten; permute folded into W0
    kernel = _make_fused_kernel(prep['meta'])
    out_shape = (n, prep['out_cols'])
    y = pl.pallas_call(
        kernel,
        out_shape=jax.ShapeDtypeStruct(out_shape, jnp.float32),
        in_specs=[_full_spec(x2d.shape)] + [_full_spec(t.shape) for t in prep['tensors']],
        out_specs=_full_spec(out_shape),
    )(x2d, *prep['tensors'])
    oh, ow, c = prep['out_oh'], prep['out_ow'], prep['out_c']
    y = y[:, :oh * ow * c].reshape(n, oh, ow, c)
    # Reference returns the 4D conv-stack output `x` (NCHW in PyTorch).
    return jnp.transpose(y, (0, 3, 1, 2))


if __name__ == "__main__":
    args = Args()
    key = jax.random.PRNGKey(0)
    kx, kp = jax.random.split(key)

    x = jax.random.normal(kx, (2, args.img_channel_num, 16, 16), jnp.float32)
    params = init_params(args, kp)
    prep = prepare_discriminator(args, params, 16, 16)

    fwd = jax.jit(lambda inp: discriminator_forward(args, prep, inp))
    y = jax.block_until_ready(fwd(x))

    # 16 --(4,2,1)--> 8 --(4,2,1)--> 4 --(4,1,0)--> 1 ; channels = 1+cc+dc = 13
    assert y.shape == (2, 1 + args.cc_dim + args.dc_dim, 1, 1), y.shape
    assert bool(jnp.all(jnp.isfinite(y)))
    # final layer carries Sigmoid -> outputs strictly in (0, 1)
    assert bool(jnp.all((y > 0.0) & (y < 1.0)))
    print("KERNEL_OK")
</pallas_src>

<mosaic_0001>
module attributes {stable_mosaic.version = 11 : i64} {
  func.func @kernel(%arg0: memref<2x1024xf32, #tpu.memory_space<vmem>>, %arg1: memref<1024x512xbf16, #tpu.memory_space<vmem>>, %arg2: memref<1x512xf32, #tpu.memory_space<vmem>>, %arg3: memref<512x256xbf16, #tpu.memory_space<vmem>>, %arg4: memref<1x256xf32, #tpu.memory_space<vmem>>, %arg5: memref<256x16xf32, #tpu.memory_space<vmem>>, %arg6: memref<16x256xf32, #tpu.memory_space<vmem>>, %arg7: memref<1x16xf32, #tpu.memory_space<vmem>>, %arg8: memref<1x16xf32, #tpu.memory_space<vmem>>, %arg9: memref<256x128xbf16, #tpu.memory_space<vmem>>, %arg10: memref<1x128xf32, #tpu.memory_space<vmem>>, %arg11: memref<2x128xf32, #tpu.memory_space<vmem>>) attributes {dimension_semantics = [], scalar_prefetch = 0 : i64, scratch_operands = 0 : i64, tpu.core_type = #tpu.core_type<tc>} {
    %c0 = arith.constant 0 : index
    %c0_0 = arith.constant 0 : index
    %0 = vector.load %arg0[%c0, %c0_0] : memref<2x1024xf32, #tpu.memory_space<vmem>>, vector<2x1024xf32>
    %1 = arith.truncf %0 : vector<2x1024xf32> to vector<2x1024xbf16>
    %c0_1 = arith.constant 0 : index
    %c0_2 = arith.constant 0 : index
    %2 = vector.load %arg1[%c0_1, %c0_2] : memref<1024x512xbf16, #tpu.memory_space<vmem>>, vector<1024x512xbf16>
    %cst = arith.constant dense<0.000000e+00> : vector<2x512xf32>
    %3 = tpu.matmul %1, %2, %cst {dimension_numbers = #tpu.dot_dimension_numbers<[1], [0], [0], [1], [0, 0, 1, 1], [], []>} : vector<2x1024xbf16>, vector<1024x512xbf16>, vector<2x512xf32> -> vector<2x512xf32>
    %c0_3 = arith.constant 0 : index
    %c0_4 = arith.constant 0 : index
    %4 = vector.load %arg2[%c0_3, %c0_4] : memref<1x512xf32, #tpu.memory_space<vmem>>, vector<1x512xf32>
    %5 = vector.broadcast %4 : vector<1x512xf32> to vector<2x512xf32>
    %6 = arith.addf %3, %5 : vector<2x512xf32>
    %cst_5 = arith.constant 0.000000e+00 : f32
    %7 = vector.broadcast %cst_5 : f32 to vector<2x512xf32>
    %8 = arith.cmpf oge, %6, %7 : vector<2x512xf32>
    %cst_6 = arith.constant 2.000000e-01 : f32
    %9 = vector.broadcast %cst_6 : f32 to vector<2x512xf32>
    %10 = arith.mulf %9, %6 : vector<2x512xf32>
    %11 = arith.select %8, %6, %10 : vector<2x512xi1>, vector<2x512xf32>
    %12 = arith.truncf %11 : vector<2x512xf32> to vector<2x512xbf16>
    %c0_7 = arith.constant 0 : index
    %c0_8 = arith.constant 0 : index
    %13 = vector.load %arg3[%c0_7, %c0_8] : memref<512x256xbf16, #tpu.memory_space<vmem>>, vector<512x256xbf16>
    %cst_9 = arith.constant dense<0.000000e+00> : vector<2x256xf32>
    %14 = tpu.matmul %12, %13, %cst_9 {dimension_numbers = #tpu.dot_dimension_numbers<[1], [0], [0], [1], [0, 0, 1, 1], [], []>} : vector<2x512xbf16>, vector<512x256xbf16>, vector<2x256xf32> -> vector<2x256xf32>
    %c0_10 = arith.constant 0 : index
    %c0_11 = arith.constant 0 : index
    %15 = vector.load %arg4[%c0_10, %c0_11] : memref<1x256xf32, #tpu.memory_space<vmem>>, vector<1x256xf32>
    %16 = vector.broadcast %15 : vector<1x256xf32> to vector<2x256xf32>
    %17 = arith.addf %14, %16 : vector<2x256xf32>
    %cst_12 = arith.constant dense<0.000000e+00> : vector<256xf32>
    %18 = vector.multi_reduction <add>, %17, %cst_12 [0] : vector<2x256xf32> to vector<256xf32>
    %19 = vector.shape_cast %18 : vector<256xf32> to vector<1x256xf32>
    %c0_13 = arith.constant 0 : index
    %c0_14 = arith.constant 0 : index
    %20 = vector.load %arg5[%c0_13, %c0_14] : memref<256x16xf32, #tpu.memory_space<vmem>>, vector<256x16xf32>
    %cst_15 = arith.constant dense<0.000000e+00> : vector<1x16xf32>
    %21 = tpu.matmul %19, %20, %cst_15 {dimension_numbers = #tpu.dot_dimension_numbers<[1], [0], [0], [1], [0, 0, 1, 1], [], []>} : vector<1x256xf32>, vector<256x16xf32>, vector<1x16xf32> -> vector<1x16xf32>
    %cst_16 = arith.constant 3.125000e-02 : f32
    %22 = vector.broadcast %cst_16 : f32 to vector<1x16xf32>
    %23 = arith.mulf %21, %22 : vector<1x16xf32>
    %c0_17 = arith.constant 0 : index
    %c0_18 = arith.constant 0 : index
    %24 = vector.load %arg6[%c0_17, %c0_18] : memref<16x256xf32, #tpu.memory_space<vmem>>, vector<16x256xf32>
    %cst_19 = arith.constant dense<0.000000e+00> : vector<1x256xf32>
    %25 = tpu.matmul %23, %24, %cst_19 {dimension_numbers = #tpu.dot_dimension_numbers<[1], [0], [0], [1], [0, 0, 1, 1], [], []>} : vector<1x16xf32>, vector<16x256xf32>, vector<1x256xf32> -> vector<1x256xf32>
    %26 = vector.broadcast %25 : vector<1x256xf32> to vector<2x256xf32>
    %27 = arith.subf %17, %26 : vector<2x256xf32>
    %28 = arith.mulf %27, %27 : vector<2x256xf32>
    %cst_20 = arith.constant dense<0.000000e+00> : vector<256xf32>
    %29 = vector.multi_reduction <add>, %28, %cst_20 [0] : vector<2x256xf32> to vector<256xf32>
    %30 = vector.shape_cast %29 : vector<256xf32> to vector<1x256xf32>
    %c0_21 = arith.constant 0 : index
    %c0_22 = arith.constant 0 : index
    %31 = vector.load %arg5[%c0_21, %c0_22] : memref<256x16xf32, #tpu.memory_space<vmem>>, vector<256x16xf32>
    %cst_23 = arith.constant dense<0.000000e+00> : vector<1x16xf32>
    %32 = tpu.matmul %30, %31, %cst_23 {dimension_numbers = #tpu.dot_dimension_numbers<[1], [0], [0], [1], [0, 0, 1, 1], [], []>} : vector<1x256xf32>, vector<256x16xf32>, vector<1x16xf32> -> vector<1x16xf32>
    %cst_24 = arith.constant 3.125000e-02 : f32
    %33 = vector.broadcast %cst_24 : f32 to vector<1x16xf32>
    %34 = arith.mulf %32, %33 : vector<1x16xf32>
    %c0_25 = arith.constant 0 : index
    %c0_26 = arith.constant 0 : index
    %35 = vector.load %arg7[%c0_25, %c0_26] : memref<1x16xf32, #tpu.memory_space<vmem>>, vector<1x16xf32>
    %cst_27 = arith.constant 9.99999974E-6 : f32
    %36 = vector.broadcast %cst_27 : f32 to vector<1x16xf32>
    %37 = arith.addf %34, %36 : vector<1x16xf32>
    %38 = math.rsqrt %37 : vector<1x16xf32>
    %39 = arith.mulf %35, %38 : vector<1x16xf32>
    %c0_28 = arith.constant 0 : index
    %c0_29 = arith.constant 0 : index
    %40 = vector.load %arg8[%c0_28, %c0_29] : memref<1x16xf32, #tpu.memory_space<vmem>>, vector<1x16xf32>
    %41 = arith.mulf %23, %39 : vector<1x16xf32>
    %42 = arith.subf %40, %41 : vector<1x16xf32>
    %c0_30 = arith.constant 0 : index
    %c0_31 = arith.constant 0 : index
    %43 = vector.load %arg6[%c0_30, %c0_31] : memref<16x256xf32, #tpu.memory_space<vmem>>, vector<16x256xf32>
    %cst_32 = arith.constant dense<0.000000e+00> : vector<1x256xf32>
    %44 = tpu.matmul %39, %43, %cst_32 {dimension_numbers = #tpu.dot_dimension_numbers<[1], [0], [0], [1], [0, 0, 1, 1], [], []>} : vector<1x16xf32>, vector<16x256xf32>, vector<1x256xf32> -> vector<1x256xf32>
    %45 = vector.broadcast %44 : vector<1x256xf32> to vector<2x256xf32>
    %46 = arith.mulf %17, %45 : vector<2x256xf32>
    %c0_33 = arith.constant 0 : index
    %c0_34 = arith.constant 0 : index
    %47 = vector.load %arg6[%c0_33, %c0_34] : memref<16x256xf32, #tpu.memory_space<vmem>>, vector<16x256xf32>
    %cst_35 = arith.constant dense<0.000000e+00> : vector<1x256xf32>
    %48 = tpu.matmul %42, %47, %cst_35 {dimension_numbers = #tpu.dot_dimension_numbers<[1], [0], [0], [1], [0, 0, 1, 1], [], []>} : vector<1x16xf32>, vector<16x256xf32>, vector<1x256xf32> -> vector<1x256xf32>
    %49 = vector.broadcast %48 : vector<1x256xf32> to vector<2x256xf32>
    %50 = arith.addf %46, %49 : vector<2x256xf32>
    %cst_36 = arith.constant 0.000000e+00 : f32
    %51 = vector.broadcast %cst_36 : f32 to vector<2x256xf32>
    %52 = arith.cmpf oge, %50, %51 : vector<2x256xf32>
    %cst_37 = arith.constant 2.000000e-01 : f32
    %53 = vector.broadcast %cst_37 : f32 to vector<2x256xf32>
    %54 = arith.mulf %53, %50 : vector<2x256xf32>
    %55 = arith.select %52, %50, %54 : vector<2x256xi1>, vector<2x256xf32>
    %56 = arith.truncf %55 : vector<2x256xf32> to vector<2x256xbf16>
    %c0_38 = arith.constant 0 : index
    %c0_39 = arith.constant 0 : index
    %57 = vector.load %arg9[%c0_38, %c0_39] : memref<256x128xbf16, #tpu.memory_space<vmem>>, vector<256x128xbf16>
    %cst_40 = arith.constant dense<0.000000e+00> : vector<2x128xf32>
    %58 = tpu.matmul %56, %57, %cst_40 {dimension_numbers = #tpu.dot_dimension_numbers<[1], [0], [0], [1], [0, 0, 1, 1], [], []>} : vector<2x256xbf16>, vector<256x128xbf16>, vector<2x128xf32> -> vector<2x128xf32>
    %c0_41 = arith.constant 0 : index
    %c0_42 = arith.constant 0 : index
    %59 = vector.load %arg10[%c0_41, %c0_42] : memref<1x128xf32, #tpu.memory_space<vmem>>, vector<1x128xf32>
    %60 = vector.broadcast %59 : vector<1x128xf32> to vector<2x128xf32>
    %61 = arith.addf %58, %60 : vector<2x128xf32>
    %62 = math.absf %61 : vector<2x128xf32>
    %cst_43 = arith.constant 0.000000e+00 : f32
    %63 = vector.broadcast %cst_43 : f32 to vector<2x128xf32>
    %64 = arith.subf %63, %62 : vector<2x128xf32>
    %65 = math.exp %64 : vector<2x128xf32>
    %cst_44 = arith.constant 0.000000e+00 : f32
    %66 = vector.broadcast %cst_44 : f32 to vector<2x128xf32>
    %67 = arith.cmpf oge, %61, %66 : vector<2x128xf32>
    %cst_45 = arith.constant 1.000000e+00 : f32
    %68 = vector.broadcast %cst_45 : f32 to vector<2x128xf32>
    %69 = arith.select %67, %68, %65 : vector<2x128xi1>, vector<2x128xf32>
    %cst_46 = arith.constant 1.000000e+00 : f32
    %70 = vector.broadcast %cst_46 : f32 to vector<2x128xf32>
    %71 = arith.addf %70, %65 : vector<2x128xf32>
    %72 = arith.divf %69, %71 : vector<2x128xf32>
    %c0_47 = arith.constant 0 : index
    %c0_48 = arith.constant 0 : index
    %73 = vector.load %arg11[%c0_47, %c0_48] : memref<2x128xf32, #tpu.memory_space<vmem>>, vector<2x128xf32>
    tpu.vector_store %arg11[%c0_47, %c0_48], %72 {strides = array<i32>} : memref<2x128xf32, #tpu.memory_space<vmem>>, vector<2x128xf32>,
    return
  }
}

</mosaic_0001>

<llo_original>
// kernel: _lambda_.1
$region0: #{_lambda_.1}
  #allocation0 [shape = 'u32[]', space=smem, size = 0x4, offset = 0x4, fixed_abs, tag = 'smem constant byte address 0x4 - core index']
  #allocation1 [shape = 'u32[144,128]{1,0:T(1,128)}', space=vmem, size = 0x12000, scoped, tag = 'internal scratch']
  %s0 = inlined_call_operand.vmem [shape: f32[2,1024], index: 0, kind: input, shape index: {}]
  %s1 = inlined_call_operand.vmem [shape: bf16[1024,512], index: 1, kind: input, shape index: {}]
  %s2 = inlined_call_operand.vmem [shape: f32[1,512], index: 2, kind: input, shape index: {}]
  %s3 = inlined_call_operand.vmem [shape: bf16[512,256], index: 3, kind: input, shape index: {}]
  %s4 = inlined_call_operand.vmem [shape: f32[1,256], index: 4, kind: input, shape index: {}]
  %s5 = inlined_call_operand.vmem [shape: f32[256,16], index: 5, kind: input, shape index: {}]
  %s6 = inlined_call_operand.vmem [shape: f32[16,256], index: 6, kind: input, shape index: {}]
  %s7 = inlined_call_operand.vmem [shape: f32[1,16], index: 7, kind: input, shape index: {}]
  %s8 = inlined_call_operand.vmem [shape: f32[1,16], index: 8, kind: input, shape index: {}]
  %s9 = inlined_call_operand.vmem [shape: bf16[256,128], index: 9, kind: input, shape index: {}]
  %s10 = inlined_call_operand.vmem [shape: f32[1,128], index: 10, kind: input, shape index: {}]
  %s11 = inlined_call_operand.hbm [shape: f32[2,128], index: 11, kind: output, shape index: {}]
  %s12 = sld [smem:[#allocation0]]
  $region54: #{_lambda_.1} parent=0
    _
  %s14 = ssub.s32 1, %s12
  %s15 = scalar_select 0, %s14, %s12
  $region1: #{_lambda_.1} parent=0
    #allocation2 [shape = 'u8[1024]{0}', space=vmem, size = 0x400, scoped, tag = 'output window, operand 0, single buffered']
    #allocation3 [shape = 's32[1]{0}', space=sflag, size = 0x4, scoped, tag = 'scoped memory for _lambda_.1']
    %16 = vsyncpa [#allocation3], 0
    // Predicated region
    $region2: #{_lambda_.1} parent=1 // pred_check
      _
    $region3: #{_lambda_.1} parent=1 // pred_check_branch
      %18 = sbr.rel (0) target = $region5
    $region4: #{_lambda_.1} parent=1 // pred_region
      _
    $region5: #{_lambda_.1} parent=1 // pred_fallthru
      _
    // Predicated region
    $region6: #{_lambda_.1} parent=1 // pred_check
      _
    $region7: #{_lambda_.1} parent=1 // pred_check_branch
      %20 = sbr.rel (0) target = $region9
    $region8: #{_lambda_.1} parent=1 // pred_region
      _
    $region9: #{_lambda_.1} parent=1 // pred_fallthru
      _
    // Predicated region
    $region10: #{_lambda_.1} parent=1 // pred_check
      _
    $region11: #{_lambda_.1} parent=1 // pred_check_branch
      %22 = sbr.rel (0) target = $region13
    $region12: #{_lambda_.1} parent=1 // pred_region
      _
    $region13: #{_lambda_.1} parent=1 // pred_fallthru
      _
    // Predicated region
    $region14: #{_lambda_.1} parent=1 // pred_check
      _
    $region15: #{_lambda_.1} parent=1 // pred_check_branch
      %24 = sbr.rel (0) target = $region17
    $region16: #{_lambda_.1} parent=1 // pred_region
      _
    $region17: #{_lambda_.1} parent=1 // pred_fallthru
      _
    // Predicated region
    $region18: #{_lambda_.1} parent=1 // pred_check
      _
    $region19: #{_lambda_.1} parent=1 // pred_check_branch
      %26 = sbr.rel (0) target = $region21
    $region20: #{_lambda_.1} parent=1 // pred_region
      _
    $region21: #{_lambda_.1} parent=1 // pred_fallthru
      _
    // Predicated region
    $region22: #{_lambda_.1} parent=1 // pred_check
      _
    $region23: #{_lambda_.1} parent=1 // pred_check_branch
      %28 = sbr.rel (0) target = $region25
    $region24: #{_lambda_.1} parent=1 // pred_region
      _
    $region25: #{_lambda_.1} parent=1 // pred_fallthru
      _
    // Predicated region
    $region26: #{_lambda_.1} parent=1 // pred_check
      _
    $region27: #{_lambda_.1} parent=1 // pred_check_branch
      %30 = sbr.rel (0) target = $region29
    $region28: #{_lambda_.1} parent=1 // pred_region
      _
    $region29: #{_lambda_.1} parent=1 // pred_fallthru
      _
    // Predicated region
    $region30: #{_lambda_.1} parent=1 // pred_check
      _
    $region31: #{_lambda_.1} parent=1 // pred_check_branch
      %32 = sbr.rel (0) target = $region33
    $region32: #{_lambda_.1} parent=1 // pred_region
      _
    $region33: #{_lambda_.1} parent=1 // pred_fallthru
      _
    // Predicated region
    $region34: #{_lambda_.1} parent=1 // pred_check
      _
    $region35: #{_lambda_.1} parent=1 // pred_check_branch
      %34 = sbr.rel (0) target = $region37
    $region36: #{_lambda_.1} parent=1 // pred_region
      _
    $region37: #{_lambda_.1} parent=1 // pred_fallthru
      _
    // Predicated region
    $region38: #{_lambda_.1} parent=1 // pred_check
      _
    $region39: #{_lambda_.1} parent=1 // pred_check_branch
      %36 = sbr.rel (0) target = $region41
    $region40: #{_lambda_.1} parent=1 // pred_region
      _
    $region41: #{_lambda_.1} parent=1 // pred_fallthru
      _
    // Predicated region
    $region42: #{_lambda_.1} parent=1 // pred_check
      _
    $region43: #{_lambda_.1} parent=1 // pred_check_branch
      %38 = sbr.rel (0) target = $region45
    $region44: #{_lambda_.1} parent=1 // pred_region
      _
    $region45: #{_lambda_.1} parent=1 // pred_fallthru
      _
    %v40 = vld [vmem:[%s0] sm:$0xff]
    %v41 = vld [vmem:[%s0 + $0x8] sm:$0xff]
    %v44 = vcombine.high %v40, %v40
    %v46 = vunpack.c.l.s4 1983009808
    %v47 = vunpack.c.0.s8 %v46
    %v48 = vlaneseq
    %v49 = vshrl.u32 %v48, 7
    %v50 = vsub.s32 %v47, %v49
    %v51 = vrot.slane %v40, %v50
    %v53 = vunpack.c.l.s4 1983009808
    %v54 = vunpack.c.0.s8 %v53
    %v55 = vlaneseq
    %v56 = vshrl.u32 %v55, 7
    %v57 = vsub.s32 %v54, %v56
    %v58 = vrot.slane %v44, %v57
    %v59 = vcombine.high %v51, %v51
    %v60 = vcombine.high %v58, %v58
    %v61 = vcombine.high %v41, %v41
    %v63 = vunpack.c.l.s4 1983009808
    %v64 = vunpack.c.0.s8 %v63
    %v65 = vlaneseq
    %v66 = vshrl.u32 %v65, 7
    %v67 = vsub.s32 %v64, %v66
    %v68 = vrot.slane %v41, %v67
    %v70 = vunpack.c.l.s4 1983009808
    %v71 = vunpack.c.0.s8 %v70
    %v72 = vlaneseq
    %v73 = vshrl.u32 %v72, 7
    %v74 = vsub.s32 %v71, %v73
    %v75 = vrot.slane %v61, %v74
    %v76 = vcombine.high %v68, %v68
    %v77 = vcombine.high %v75, %v75
    %v86 = vpack.c.bf16 %v51, %v51
    %v87 = vpack.c.bf16 %v59, %v59
    %v88 = vpack.c.bf16 %v58, %v58
    %v89 = vpack.c.bf16 %v60, %v60
    %v90 = vpack.c.bf16 %v68, %v68
    %v91 = vpack.c.bf16 %v76, %v76
    %v92 = vpack.c.bf16 %v75, %v75
    %v93 = vpack.c.bf16 %v77, %v77
    %v94 = vld [vmem:[%s1] sm:$0xff]
    %v95 = vld [vmem:[%s1 + $0x8] sm:$0xff]
    %v96 = vld [vmem:[%s1 + $0x10] sm:$0xff]
    %v97 = vld [vmem:[%s1 + $0x18] sm:$0xff]
    %v98 = vld [vmem:[%s1 + $0x20] sm:$0xff]
    %v99 = vld [vmem:[%s1 + $0x28] sm:$0xff]
    %v100 = vld [vmem:[%s1 + $0x30] sm:$0xff]
    %v101 = vld [vmem:[%s1 + $0x38] sm:$0xff]
    %v102 = vld [vmem:[%s1 + $0x40] sm:$0xff]
    %v103 = vld [vmem:[%s1 + $0x48] sm:$0xff]
    %v104 = vld [vmem:[%s1 + $0x50] sm:$0xff]
    %v105 = vld [vmem:[%s1 + $0x58] sm:$0xff]
    %v106 = vld [vmem:[%s1 + $0x60] sm:$0xff]
    %v107 = vld [vmem:[%s1 + $0x68] sm:$0xff]
    %v108 = vld [vmem:[%s1 + $0x70] sm:$0xff]
    %v109 = vld [vmem:[%s1 + $0x78] sm:$0xff]
    %v110 = vld [vmem:[%s1 + $0x80] sm:$0xff]
    %v111 = vld [vmem:[%s1 + $0x88] sm:$0xff]
    %v112 = vld [vmem:[%s1 + $0x90] sm:$0xff]
    %v113 = vld [vmem:[%s1 + $0x98] sm:$0xff]
    %v114 = vld [vmem:[%s1 + $0xa0] sm:$0xff]
    %v115 = vld [vmem:[%s1 + $0xa8] sm:$0xff]
    %v116 = vld [vmem:[%s1 + $0xb0] sm:$0xff]
    %v117 = vld [vmem:[%s1 + $0xb8] sm:$0xff]
    %v118 = vld [vmem:[%s1 + $0xc0] sm:$0xff]
    %v119 = vld [vmem:[%s1 + $0xc8] sm:$0xff]
    %v120 = vld [vmem:[%s1 + $0xd0] sm:$0xff]
    %v121 = vld [vmem:[%s1 + $0xd8] sm:$0xff]
    %v122 = vld [vmem:[%s1 + $0xe0] sm:$0xff]
    %v123 = vld [vmem:[%s1 + $0xe8] sm:$0xff]
    %v124 = vld [vmem:[%s1 + $0xf0] sm:$0xff]
    %v125 = vld [vmem:[%s1 + $0xf8] sm:$0xff]
    %v126 = vld [vmem:[%s1 + $0x100] sm:$0xff]
    %v127 = vld [vmem:[%s1 + $0x108] sm:$0xff]
    %v128 = vld [vmem:[%s1 + $0x110] sm:$0xff]
    %v129 = vld [vmem:[%s1 + $0x118] sm:$0xff]
    %v130 = vld [vmem:[%s1 + $0x120] sm:$0xff]
    %v131 = vld [vmem:[%s1 + $0x128] sm:$0xff]
    %v132 = vld [vmem:[%s1 + $0x130] sm:$0xff]
    %v133 = vld [vmem:[%s1 + $0x138] sm:$0xff]
    %v134 = vld [vmem:[%s1 + $0x140] sm:$0xff]
    %v135 = vld [vmem:[%s1 + $0x148] sm:$0xff]
    %v136 = vld [vmem:[%s1 + $0x150] sm:$0xff]
    %v137 = vld [vmem:[%s1 + $0x158] sm:$0xff]
    %v138 = vld [vmem:[%s1 + $0x160] sm:$0xff]
    %v139 = vld [vmem:[%s1 + $0x168] sm:$0xff]
    %v140 = vld [vmem:[%s1 + $0x170] sm:$0xff]
    %v141 = vld [vmem:[%s1 + $0x178] sm:$0xff]
    %v142 = vld [vmem:[%s1 + $0x180] sm:$0xff]
    %v143 = vld [vmem:[%s1 + $0x188] sm:$0xff]
    %v144 = vld [vmem:[%s1 + $0x190] sm:$0xff]
    %v145 = vld [vmem:[%s1 + $0x198] sm:$0xff]
    %v146 = vld [vmem:[%s1 + $0x1a0] sm:$0xff]
    %v147 = vld [vmem:[%s1 + $0x1a8] sm:$0xff]
    %v148 = vld [vmem:[%s1 + $0x1b0] sm:$0xff]
    %v149 = vld [vmem:[%s1 + $0x1b8] sm:$0xff]
    %v150 = vld [vmem:[%s1 + $0x1c0] sm:$0xff]
    %v151 = vld [vmem:[%s1 + $0x1c8] sm:$0xff]
    %v152 = vld [vmem:[%s1 + $0x1d0] sm:$0xff]
    %v153 = vld [vmem:[%s1 + $0x1d8] sm:$0xff]
    %v154 = vld [vmem:[%s1 + $0x1e0] sm:$0xff]
    %v155 = vld [vmem:[%s1 + $0x1e8] sm:$0xff]
    %v156 = vld [vmem:[%s1 + $0x1f0] sm:$0xff]
    %v157 = vld [vmem:[%s1 + $0x1f8] sm:$0xff]
    %v158 = vld [vmem:[%s1 + $0x200] sm:$0xff]
    %v159 = vld [vmem:[%s1 + $0x208] sm:$0xff]
    %v160 = vld [vmem:[%s1 + $0x210] sm:$0xff]
    %v161 = vld [vmem:[%s1 + $0x218] sm:$0xff]
    %v162 = vld [vmem:[%s1 + $0x220] sm:$0xff]
    %v163 = vld [vmem:[%s1 + $0x228] sm:$0xff]
    %v164 = vld [vmem:[%s1 + $0x230] sm:$0xff]
    %v165 = vld [vmem:[%s1 + $0x238] sm:$0xff]
    %v166 = vld [vmem:[%s1 + $0x240] sm:$0xff]
    %v167 = vld [vmem:[%s1 + $0x248] sm:$0xff]
    %v168 = vld [vmem:[%s1 + $0x250] sm:$0xff]
    %v169 = vld [vmem:[%s1 + $0x258] sm:$0xff]
    %v170 = vld [vmem:[%s1 + $0x260] sm:$0xff]
    %v171 = vld [vmem:[%s1 + $0x268] sm:$0xff]
    %v172 = vld [vmem:[%s1 + $0x270] sm:$0xff]
    %v173 = vld [vmem:[%s1 + $0x278] sm:$0xff]
    %v174 = vld [vmem:[%s1 + $0x280] sm:$0xff]
    %v175 = vld [vmem:[%s1 + $0x288] sm:$0xff]
    %v176 = vld [vmem:[%s1 + $0x290] sm:$0xff]
    %v177 = vld [vmem:[%s1 + $0x298] sm:$0xff]
    %v178 = vld [vmem:[%s1 + $0x2a0] sm:$0xff]
    %v179 = vld [vmem:[%s1 + $0x2a8] sm:$0xff]
    %v180 = vld [vmem:[%s1 + $0x2b0] sm:$0xff]
    %v181 = vld [vmem:[%s1 + $0x2b8] sm:$0xff]
    %v182 = vld [vmem:[%s1 + $0x2c0] sm:$0xff]
    %v183 = vld [vmem:[%s1 + $0x2c8] sm:$0xff]
    %v184 = vld [vmem:[%s1 + $0x2d0] sm:$0xff]
    %v185 = vld [vmem:[%s1 + $0x2d8] sm:$0xff]
    %v186 = vld [vmem:[%s1 + $0x2e0] sm:$0xff]
    %v187 = vld [vmem:[%s1 + $0x2e8] sm:$0xff]
    %v188 = vld [vmem:[%s1 + $0x2f0] sm:$0xff]
    %v189 = vld [vmem:[%s1 + $0x2f8] sm:$0xff]
    %v190 = vld [vmem:[%s1 + $0x300] sm:$0xff]
    %v191 = vld [vmem:[%s1 + $0x308] sm:$0xff]
    %v192 = vld [vmem:[%s1 + $0x310] sm:$0xff]
    %v193 = vld [vmem:[%s1 + $0x318] sm:$0xff]
    %v194 = vld [vmem:[%s1 + $0x320] sm:$0xff]
    %v195 = vld [vmem:[%s1 + $0x328] sm:$0xff]
    %v196 = vld [vmem:[%s1 + $0x330] sm:$0xff]
    %v197 = vld [vmem:[%s1 + $0x338] sm:$0xff]
    %v198 = vld [vmem:[%s1 + $0x340] sm:$0xff]
    %v199 = vld [vmem:[%s1 + $0x348] sm:$0xff]
    %v200 = vld [vmem:[%s1 + $0x350] sm:$0xff]
    %v201 = vld [vmem:[%s1 + $0x358] sm:$0xff]
    %v202 = vld [vmem:[%s1 + $0x360] sm:$0xff]
    %v203 = vld [vmem:[%s1 + $0x368] sm:$0xff]
    %v204 = vld [vmem:[%s1 + $0x370] sm:$0xff]
    %v205 = vld [vmem:[%s1 + $0x378] sm:$0xff]
    %v206 = vld [vmem:[%s1 + $0x380] sm:$0xff]
    %v207 = vld [vmem:[%s1 + $0x388] sm:$0xff]
    %v208 = vld [vmem:[%s1 + $0x390] sm:$0xff]
    %v209 = vld [vmem:[%s1 + $0x398] sm:$0xff]
    %v210 = vld [vmem:[%s1 + $0x3a0] sm:$0xff]
    %v211 = vld [vmem:[%s1 + $0x3a8] sm:$0xff]
    %v212 = vld [vmem:[%s1 + $0x3b0] sm:$0xff]
    %v213 = vld [vmem:[%s1 + $0x3b8] sm:$0xff]
    %v214 = vld [vmem:[%s1 + $0x3c0] sm:$0xff]
    %v215 = vld [vmem:[%s1 + $0x3c8] sm:$0xff]
    %v216 = vld [vmem:[%s1 + $0x3d0] sm:$0xff]
    %v217 = vld [vmem:[%s1 + $0x3d8] sm:$0xff]
    %v218 = vld [vmem:[%s1 + $0x3e0] sm:$0xff]
    %v219 = vld [vmem:[%s1 + $0x3e8] sm:$0xff]
    %v220 = vld [vmem:[%s1 + $0x3f0] sm:$0xff]
    %v221 = vld [vmem:[%s1 + $0x3f8] sm:$0xff]
    %v222 = vld [vmem:[%s1 + $0x400] sm:$0xff]
    %v223 = vld [vmem:[%s1 + $0x408] sm:$0xff]
    %v224 = vld [vmem:[%s1 + $0x410] sm:$0xff]
    %v225 = vld [vmem:[%s1 + $0x418] sm:$0xff]
    %v226 = vld [vmem:[%s1 + $0x420] sm:$0xff]
    %v227 = vld [vmem:[%s1 + $0x428] sm:$0xff]
    %v228 = vld [vmem:[%s1 + $0x430] sm:$0xff]
    %v229 = vld [vmem:[%s1 + $0x438] sm:$0xff]
    %v230 = vld [vmem:[%s1 + $0x440] sm:$0xff]
    %v231 = vld [vmem:[%s1 + $0x448] sm:$0xff]
    %v232 = vld [vmem:[%s1 + $0x450] sm:$0xff]
    %v233 = vld [vmem:[%s1 + $0x458] sm:$0xff]
    %v234 = vld [vmem:[%s1 + $0x460] sm:$0xff]
    %v235 = vld [vmem:[%s1 + $0x468] sm:$0xff]
    %v236 = vld [vmem:[%s1 + $0x470] sm:$0xff]
    %v237 = vld [vmem:[%s1 + $0x478] sm:$0xff]
    %v238 = vld [vmem:[%s1 + $0x480] sm:$0xff]
    %v239 = vld [vmem:[%s1 + $0x488] sm:$0xff]
    %v240 = vld [vmem:[%s1 + $0x490] sm:$0xff]
    %v241 = vld [vmem:[%s1 + $0x498] sm:$0xff]
    %v242 = vld [vmem:[%s1 + $0x4a0] sm:$0xff]
    %v243 = vld [vmem:[%s1 + $0x4a8] sm:$0xff]
    %v244 = vld [vmem:[%s1 + $0x4b0] sm:$0xff]
    %v245 = vld [vmem:[%s1 + $0x4b8] sm:$0xff]
    %v246 = vld [vmem:[%s1 + $0x4c0] sm:$0xff]
    %v247 = vld [vmem:[%s1 + $0x4c8] sm:$0xff]
    %v248 = vld [vmem:[%s1 + $0x4d0] sm:$0xff]
    %v249 = vld [vmem:[%s1 + $0x4d8] sm:$0xff]
    %v250 = vld [vmem:[%s1 + $0x4e0] sm:$0xff]
    %v251 = vld [vmem:[%s1 + $0x4e8] sm:$0xff]
    %v252 = vld [vmem:[%s1 + $0x4f0] sm:$0xff]
    %v253 = vld [vmem:[%s1 + $0x4f8] sm:$0xff]
    %v254 = vld [vmem:[%s1 + $0x500] sm:$0xff]
    %v255 = vld [vmem:[%s1 + $0x508] sm:$0xff]
    %v256 = vld [vmem:[%s1 + $0x510] sm:$0xff]
    %v257 = vld [vmem:[%s1 + $0x518] sm:$0xff]
    %v258 = vld [vmem:[%s1 + $0x520] sm:$0xff]
    %v259 = vld [vmem:[%s1 + $0x528] sm:$0xff]
    %v260 = vld [vmem:[%s1 + $0x530] sm:$0xff]
    %v261 = vld [vmem:[%s1 + $0x538] sm:$0xff]
    %v262 = vld [vmem:[%s1 + $0x540] sm:$0xff]
    %v263 = vld [vmem:[%s1 + $0x548] sm:$0xff]
    %v264 = vld [vmem:[%s1 + $0x550] sm:$0xff]
    %v265 = vld [vmem:[%s1 + $0x558] sm:$0xff]
    %v266 = vld [vmem:[%s1 + $0x560] sm:$0xff]
    %v267 = vld [vmem:[%s1 + $0x568] sm:$0xff]
    %v268 = vld [vmem:[%s1 + $0x570] sm:$0xff]
    %v269 = vld [vmem:[%s1 + $0x578] sm:$0xff]
    %v270 = vld [vmem:[%s1 + $0x580] sm:$0xff]
    %v271 = vld [vmem:[%s1 + $0x588] sm:$0xff]
    %v272 = vld [vmem:[%s1 + $0x590] sm:$0xff]
    %v273 = vld [vmem:[%s1 + $0x598] sm:$0xff]
    %v274 = vld [vmem:[%s1 + $0x5a0] sm:$0xff]
    %v275 = vld [vmem:[%s1 + $0x5a8] sm:$0xff]
    %v276 = vld [vmem:[%s1 + $0x5b0] sm:$0xff]
    %v277 = vld [vmem:[%s1 + $0x5b8] sm:$0xff]
    %v278 = vld [vmem:[%s1 + $0x5c0] sm:$0xff]
    %v279 = vld [vmem:[%s1 + $0x5c8] sm:$0xff]
    %v280 = vld [vmem:[%s1 + $0x5d0] sm:$0xff]
    %v281 = vld [vmem:[%s1 + $0x5d8] sm:$0xff]
    %v282 = vld [vmem:[%s1 + $0x5e0] sm:$0xff]
    %v283 = vld [vmem:[%s1 + $0x5e8] sm:$0xff]
    %v284 = vld [vmem:[%s1 + $0x5f0] sm:$0xff]
    %v285 = vld [vmem:[%s1 + $0x5f8] sm:$0xff]
    %v286 = vld [vmem:[%s1 + $0x600] sm:$0xff]
    %v287 = vld [vmem:[%s1 + $0x608] sm:$0xff]
    %v288 = vld [vmem:[%s1 + $0x610] sm:$0xff]
    %v289 = vld [vmem:[%s1 + $0x618] sm:$0xff]
    %v290 = vld [vmem:[%s1 + $0x620] sm:$0xff]
    %v291 = vld [vmem:[%s1 + $0x628] sm:$0xff]
    %v292 = vld [vmem:[%s1 + $0x630] sm:$0xff]
    %v293 = vld [vmem:[%s1 + $0x638] sm:$0xff]
    %v294 = vld [vmem:[%s1 + $0x640] sm:$0xff]
    %v295 = vld [vmem:[%s1 + $0x648] sm:$0xff]
    %v296 = vld [vmem:[%s1 + $0x650] sm:$0xff]
    %v297 = vld [vmem:[%s1 + $0x658] sm:$0xff]
    %v298 = vld [vmem:[%s1 + $0x660] sm:$0xff]
    %v299 = vld [vmem:[%s1 + $0x668] sm:$0xff]
    %v300 = vld [vmem:[%s1 + $0x670] sm:$0xff]
    %v301 = vld [vmem:[%s1 + $0x678] sm:$0xff]
    %v302 = vld [vmem:[%s1 + $0x680] sm:$0xff]
    %v303 = vld [vmem:[%s1 + $0x688] sm:$0xff]
    %v304 = vld [vmem:[%s1 + $0x690] sm:$0xff]
    %v305 = vld [vmem:[%s1 + $0x698] sm:$0xff]
    %v306 = vld [vmem:[%s1 + $0x6a0] sm:$0xff]
    %v307 = vld [vmem:[%s1 + $0x6a8] sm:$0xff]
    %v308 = vld [vmem:[%s1 + $0x6b0] sm:$0xff]
    %v309 = vld [vmem:[%s1 + $0x6b8] sm:$0xff]
    %v310 = vld [vmem:[%s1 + $0x6c0] sm:$0xff]
    %v311 = vld [vmem:[%s1 + $0x6c8] sm:$0xff]
    %v312 = vld [vmem:[%s1 + $0x6d0] sm:$0xff]
    %v313 = vld [vmem:[%s1 + $0x6d8] sm:$0xff]
    %v314 = vld [vmem:[%s1 + $0x6e0] sm:$0xff]
    %v315 = vld [vmem:[%s1 + $0x6e8] sm:$0xff]
    %v316 = vld [vmem:[%s1 + $0x6f0] sm:$0xff]
    %v317 = vld [vmem:[%s1 + $0x6f8] sm:$0xff]
    %v318 = vld [vmem:[%s1 + $0x700] sm:$0xff]
    %v319 = vld [vmem:[%s1 + $0x708] sm:$0xff]
    %v320 = vld [vmem:[%s1 + $0x710] sm:$0xff]
    %v321 = vld [vmem:[%s1 + $0x718] sm:$0xff]
    %v322 = vld [vmem:[%s1 + $0x720] sm:$0xff]
    %v323 = vld [vmem:[%s1 + $0x728] sm:$0xff]
    %v324 = vld [vmem:[%s1 + $0x730] sm:$0xff]
    %v325 = vld [vmem:[%s1 + $0x738] sm:$0xff]
    %v326 = vld [vmem:[%s1 + $0x740] sm:$0xff]
    %v327 = vld [vmem:[%s1 + $0x748] sm:$0xff]
    %v328 = vld [vmem:[%s1 + $0x750] sm:$0xff]
    %v329 = vld [vmem:[%s1 + $0x758] sm:$0xff]
    %v330 = vld [vmem:[%s1 + $0x760] sm:$0xff]
    %v331 = vld [vmem:[%s1 + $0x768] sm:$0xff]
    %v332 = vld [vmem:[%s1 + $0x770] sm:$0xff]
    %v333 = vld [vmem:[%s1 + $0x778] sm:$0xff]
    %v334 = vld [vmem:[%s1 + $0x780] sm:$0xff]
    %v335 = vld [vmem:[%s1 + $0x788] sm:$0xff]
    %v336 = vld [vmem:[%s1 + $0x790] sm:$0xff]
    %v337 = vld [vmem:[%s1 + $0x798] sm:$0xff]
    %v338 = vld [vmem:[%s1 + $0x7a0] sm:$0xff]
    %v339 = vld [vmem:[%s1 + $0x7a8] sm:$0xff]
    %v340 = vld [vmem:[%s1 + $0x7b0] sm:$0xff]
    %v341 = vld [vmem:[%s1 + $0x7b8] sm:$0xff]
    %v342 = vld [vmem:[%s1 + $0x7c0] sm:$0xff]
    %v343 = vld [vmem:[%s1 + $0x7c8] sm:$0xff]
    %v344 = vld [vmem:[%s1 + $0x7d0] sm:$0xff]
    %v345 = vld [vmem:[%s1 + $0x7d8] sm:$0xff]
    %v346 = vld [vmem:[%s1 + $0x7e0] sm:$0xff]
    %v347 = vld [vmem:[%s1 + $0x7e8] sm:$0xff]
    %v348 = vld [vmem:[%s1 + $0x7f0] sm:$0xff]
    %v349 = vld [vmem:[%s1 + $0x7f8] sm:$0xff]
    %v350 = vld [vmem:[%s2] sm:$0xf]
    %v352 = vlaneseq
    %v353 = vshrl.u32 %v352, 7
    %v354 = vsub.s32 0, %v353
    %v355 = vrot.slane %v350, %v354
    %v356 = vlaneseq
    %v357 = vshrl.u32 %v356, 7
    %v358 = vsub.s32 1, %v357
    %v359 = vrot.slane %v350, %v358
    %v360 = vlaneseq
    %v361 = vshrl.u32 %v360, 7
    %v362 = vsub.s32 2, %v361
    %v363 = vrot.slane %v350, %v362
    %v364 = vlaneseq
    %v365 = vshrl.u32 %v364, 7
    %v366 = vsub.s32 3, %v365
    %v367 = vrot.slane %v350, %v366
    %v628 = vunpack.c.l.b16 %v94
    %v629 = vunpack.c.h.b16 %v94
    %v630 = vunpack.c.l.b16 %v95
    %v631 = vunpack.c.h.b16 %v95
    %v632 = vunpack.c.l.b16 %v96
    %v633 = vunpack.c.h.b16 %v96
    %v634 = vunpack.c.l.b16 %v97
    %v635 = vunpack.c.h.b16 %v97
    %v636 = vunpack.c.l.b16 %v98
    %v637 = vunpack.c.h.b16 %v98
    %v638 = vunpack.c.l.b16 %v99
    %v639 = vunpack.c.h.b16 %v99
    %v640 = vunpack.c.l.b16 %v100
    %v641 = vunpack.c.h.b16 %v100
    %v642 = vunpack.c.l.b16 %v101
    %v643 = vunpack.c.h.b16 %v101
    %v644 = vunpack.c.l.b16 %v102
    %v645 = vunpack.c.h.b16 %v102
    %v646 = vunpack.c.l.b16 %v103
    %v647 = vunpack.c.h.b16 %v103
    %v648 = vunpack.c.l.b16 %v104
    %v649 = vunpack.c.h.b16 %v104
    %v650 = vunpack.c.l.b16 %v105
    %v651 = vunpack.c.h.b16 %v105
    %v652 = vunpack.c.l.b16 %v106
    %v653 = vunpack.c.h.b16 %v106
    %v654 = vunpack.c.l.b16 %v107
    %v655 = vunpack.c.h.b16 %v107
    %v656 = vunpack.c.l.b16 %v108
    %v657 = vunpack.c.h.b16 %v108
    %v658 = vunpack.c.l.b16 %v109
    %v659 = vunpack.c.h.b16 %v109
    %v660 = vunpack.c.l.b16 %v110
    %v661 = vunpack.c.h.b16 %v110
    %v662 = vunpack.c.l.b16 %v111
    %v663 = vunpack.c.h.b16 %v111
    %v664 = vunpack.c.l.b16 %v112
    %v665 = vunpack.c.h.b16 %v112
    %v666 = vunpack.c.l.b16 %v113
    %v667 = vunpack.c.h.b16 %v113
    %v668 = vunpack.c.l.b16 %v114
    %v669 = vunpack.c.h.b16 %v114
    %v670 = vunpack.c.l.b16 %v115
    %v671 = vunpack.c.h.b16 %v115
    %v672 = vunpack.c.l.b16 %v116
    %v673 = vunpack.c.h.b16 %v116
    %v674 = vunpack.c.l.b16 %v117
    %v675 = vunpack.c.h.b16 %v117
    %v676 = vunpack.c.l.b16 %v118
    %v677 = vunpack.c.h.b16 %v118
    %v678 = vunpack.c.l.b16 %v119
    %v679 = vunpack.c.h.b16 %v119
    %v680 = vunpack.c.l.b16 %v120
    %v681 = vunpack.c.h.b16 %v120
    %v682 = vunpack.c.l.b16 %v121
    %v683 = vunpack.c.h.b16 %v121
    %v684 = vunpack.c.l.b16 %v122
    %v685 = vunpack.c.h.b16 %v122
    %v686 = vunpack.c.l.b16 %v123
    %v687 = vunpack.c.h.b16 %v123
    %v688 = vunpack.c.l.b16 %v124
    %v689 = vunpack.c.h.b16 %v124
    %v690 = vunpack.c.l.b16 %v125
    %v691 = vunpack.c.h.b16 %v125
    %v692 = vunpack.c.l.b16 %v126
    %v693 = vunpack.c.h.b16 %v126
    %v694 = vunpack.c.l.b16 %v127
    %v695 = vunpack.c.h.b16 %v127
    %v696 = vunpack.c.l.b16 %v128
    %v697 = vunpack.c.h.b16 %v128
    %v698 = vunpack.c.l.b16 %v129
    %v699 = vunpack.c.h.b16 %v129
    %v700 = vunpack.c.l.b16 %v130
    %v701 = vunpack.c.h.b16 %v130
    %v702 = vunpack.c.l.b16 %v131
    %v703 = vunpack.c.h.b16 %v131
    %v704 = vunpack.c.l.b16 %v132
    %v705 = vunpack.c.h.b16 %v132
    %v706 = vunpack.c.l.b16 %v133
    %v707 = vunpack.c.h.b16 %v133
    %v708 = vunpack.c.l.b16 %v134
    %v709 = vunpack.c.h.b16 %v134
    %v710 = vunpack.c.l.b16 %v135
    %v711 = vunpack.c.h.b16 %v135
    %v712 = vunpack.c.l.b16 %v136
    %v713 = vunpack.c.h.b16 %v136
    %v714 = vunpack.c.l.b16 %v137
    %v715 = vunpack.c.h.b16 %v137
    %v716 = vunpack.c.l.b16 %v138
    %v717 = vunpack.c.h.b16 %v138
    %v718 = vunpack.c.l.b16 %v139
    %v719 = vunpack.c.h.b16 %v139
    %v720 = vunpack.c.l.b16 %v140
    %v721 = vunpack.c.h.b16 %v140
    %v722 = vunpack.c.l.b16 %v141
    %v723 = vunpack.c.h.b16 %v141
    %v724 = vunpack.c.l.b16 %v142
    %v725 = vunpack.c.h.b16 %v142
    %v726 = vunpack.c.l.b16 %v143
    %v727 = vunpack.c.h.b16 %v143
    %v728 = vunpack.c.l.b16 %v144
    %v729 = vunpack.c.h.b16 %v144
    %v730 = vunpack.c.l.b16 %v145
    %v731 = vunpack.c.h.b16 %v145
    %v732 = vunpack.c.l.b16 %v146
    %v733 = vunpack.c.h.b16 %v146
    %v734 = vunpack.c.l.b16 %v147
    %v735 = vunpack.c.h.b16 %v147
    %v736 = vunpack.c.l.b16 %v148
    %v737 = vunpack.c.h.b16 %v148
    %v738 = vunpack.c.l.b16 %v149
    %v739 = vunpack.c.h.b16 %v149
    %v740 = vunpack.c.l.b16 %v150
    %v741 = vunpack.c.h.b16 %v150
    %v742 = vunpack.c.l.b16 %v151
    %v743 = vunpack.c.h.b16 %v151
    %v744 = vunpack.c.l.b16 %v152
    %v745 = vunpack.c.h.b16 %v152
    %v746 = vunpack.c.l.b16 %v153
    %v747 = vunpack.c.h.b16 %v153
    %v748 = vunpack.c.l.b16 %v154
    %v749 = vunpack.c.h.b16 %v154
    %v750 = vunpack.c.l.b16 %v155
    %v751 = vunpack.c.h.b16 %v155
    %v752 = vunpack.c.l.b16 %v156
    %v753 = vunpack.c.h.b16 %v156
    %v754 = vunpack.c.l.b16 %v157
    %v755 = vunpack.c.h.b16 %v157
    %v756 = vunpack.c.l.b16 %v158
    %v757 = vunpack.c.h.b16 %v158
    %v758 = vunpack.c.l.b16 %v159
    %v759 = vunpack.c.h.b16 %v159
    %v760 = vunpack.c.l.b16 %v160
    %v761 = vunpack.c.h.b16 %v160
    %v762 = vunpack.c.l.b16 %v161
    %v763 = vunpack.c.h.b16 %v161
    %v764 = vunpack.c.l.b16 %v162
    %v765 = vunpack.c.h.b16 %v162
    %v766 = vunpack.c.l.b16 %v163
    %v767 = vunpack.c.h.b16 %v163
    %v768 = vunpack.c.l.b16 %v164
    %v769 = vunpack.c.h.b16 %v164
    %v770 = vunpack.c.l.b16 %v165
    %v771 = vunpack.c.h.b16 %v165
    %v772 = vunpack.c.l.b16 %v166
    %v773 = vunpack.c.h.b16 %v166
    %v774 = vunpack.c.l.b16 %v167
    %v775 = vunpack.c.h.b16 %v167
    %v776 = vunpack.c.l.b16 %v168
    %v777 = vunpack.c.h.b16 %v168
    %v778 = vunpack.c.l.b16 %v169
    %v779 = vunpack.c.h.b16 %v169
    %v780 = vunpack.c.l.b16 %v170
    %v781 = vunpack.c.h.b16 %v170
    %v782 = vunpack.c.l.b16 %v171
    %v783 = vunpack.c.h.b16 %v171
    %v784 = vunpack.c.l.b16 %v172
    %v785 = vunpack.c.h.b16 %v172
    %v786 = vunpack.c.l.b16 %v173
    %v787 = vunpack.c.h.b16 %v173
    %v788 = vunpack.c.l.b16 %v174
    %v789 = vunpack.c.h.b16 %v174
    %v790 = vunpack.c.l.b16 %v175
    %v791 = vunpack.c.h.b16 %v175
    %v792 = vunpack.c.l.b16 %v176
    %v793 = vunpack.c.h.b16 %v176
    %v794 = vunpack.c.l.b16 %v177
    %v795 = vunpack.c.h.b16 %v177
    %v796 = vunpack.c.l.b16 %v178
    %v797 = vunpack.c.h.b16 %v178
    %v798 = vunpack.c.l.b16 %v179
    %v799 = vunpack.c.h.b16 %v179
    %v800 = vunpack.c.l.b16 %v180
    %v801 = vunpack.c.h.b16 %v180
    %v802 = vunpack.c.l.b16 %v181
    %v803 = vunpack.c.h.b16 %v181
    %v804 = vunpack.c.l.b16 %v182
    %v805 = vunpack.c.h.b16 %v182
    %v806 = vunpack.c.l.b16 %v183
    %v807 = vunpack.c.h.b16 %v183
    %v808 = vunpack.c.l.b16 %v184
    %v809 = vunpack.c.h.b16 %v184
    %v810 = vunpack.c.l.b16 %v185
    %v811 = vunpack.c.h.b16 %v185
    %v812 = vunpack.c.l.b16 %v186
    %v813 = vunpack.c.h.b16 %v186
    %v814 = vunpack.c.l.b16 %v187
    %v815 = vunpack.c.h.b16 %v187
    %v816 = vunpack.c.l.b16 %v188
    %v817 = vunpack.c.h.b16 %v188
    %v818 = vunpack.c.l.b16 %v189
    %v819 = vunpack.c.h.b16 %v189
    %v820 = vunpack.c.l.b16 %v190
    %v821 = vunpack.c.h.b16 %v190
    %v822 = vunpack.c.l.b16 %v191
    %v823 = vunpack.c.h.b16 %v191
    %v824 = vunpack.c.l.b16 %v192
    %v825 = vunpack.c.h.b16 %v192
    %v826 = vunpack.c.l.b16 %v193
    %v827 = vunpack.c.h.b16 %v193
    %v828 = vunpack.c.l.b16 %v194
    %v829 = vunpack.c.h.b16 %v194
    %v830 = vunpack.c.l.b16 %v195
    %v831 = vunpack.c.h.b16 %v195
    %v832 = vunpack.c.l.b16 %v196
    %v833 = vunpack.c.h.b16 %v196
    %v834 = vunpack.c.l.b16 %v197
    %v835 = vunpack.c.h.b16 %v197
    %v836 = vunpack.c.l.b16 %v198
    %v837 = vunpack.c.h.b16 %v198
    %v838 = vunpack.c.l.b16 %v199
    %v839 = vunpack.c.h.b16 %v199
    %v840 = vunpack.c.l.b16 %v200
    %v841 = vunpack.c.h.b16 %v200
    %v842 = vunpack.c.l.b16 %v201
    %v843 = vunpack.c.h.b16 %v201
    %v844 = vunpack.c.l.b16 %v202
    %v845 = vunpack.c.h.b16 %v202
    %v846 = vunpack.c.l.b16 %v203
    %v847 = vunpack.c.h.b16 %v203
    %v848 = vunpack.c.l.b16 %v204
    %v849 = vunpack.c.h.b16 %v204
    %v850 = vunpack.c.l.b16 %v205
    %v851 = vunpack.c.h.b16 %v205
    %v852 = vunpack.c.l.b16 %v206
    %v853 = vunpack.c.h.b16 %v206
    %v854 = vunpack.c.l.b16 %v207
    %v855 = vunpack.c.h.b16 %v207
    %v856 = vunpack.c.l.b16 %v208
    %v857 = vunpack.c.h.b16 %v208
    %v858 = vunpack.c.l.b16 %v209
    %v859 = vunpack.c.h.b16 %v209
    %v860 = vunpack.c.l.b16 %v210
    %v861 = vunpack.c.h.b16 %v210
    %v862 = vunpack.c.l.b16 %v211
    %v863 = vunpack.c.h.b16 %v211
    %v864 = vunpack.c.l.b16 %v212
    %v865 = vunpack.c.h.b16 %v212
    %v866 = vunpack.c.l.b16 %v213
    %v867 = vunpack.c.h.b16 %v213
    %v868 = vunpack.c.l.b16 %v214
    %v869 = vunpack.c.h.b16 %v214
    %v870 = vunpack.c.l.b16 %v215
    %v871 = vunpack.c.h.b16 %v215
    %v872 = vunpack.c.l.b16 %v216
    %v873 = vunpack.c.h.b16 %v216
    %v874 = vunpack.c.l.b16 %v217
    %v875 = vunpack.c.h.b16 %v217
    %v876 = vunpack.c.l.b16 %v218
    %v877 = vunpack.c.h.b16 %v218
    %v878 = vunpack.c.l.b16 %v219
    %v879 = vunpack.c.h.b16 %v219
    %v880 = vunpack.c.l.b16 %v220
    %v881 = vunpack.c.h.b16 %v220
    %v882 = vunpack.c.l.b16 %v221
    %v883 = vunpack.c.h.b16 %v221
    %v884 = vunpack.c.l.b16 %v222
    %v885 = vunpack.c.h.b16 %v222
    %v886 = vunpack.c.l.b16 %v223
    %v887 = vunpack.c.h.b16 %v223
    %v888 = vunpack.c.l.b16 %v224
    %v889 = vunpack.c.h.b16 %v224
    %v890 = vunpack.c.l.b16 %v225
    %v891 = vunpack.c.h.b16 %v225
    %v892 = vunpack.c.l.b16 %v226
    %v893 = vunpack.c.h.b16 %v226
    %v894 = vunpack.c.l.b16 %v227
    %v895 = vunpack.c.h.b16 %v227
    %v896 = vunpack.c.l.b16 %v228
    %v897 = vunpack.c.h.b16 %v228
    %v898 = vunpack.c.l.b16 %v229
    %v899 = vunpack.c.h.b16 %v229
    %v900 = vunpack.c.l.b16 %v230
    %v901 = vunpack.c.h.b16 %v230
    %v902 = vunpack.c.l.b16 %v231
    %v903 = vunpack.c.h.b16 %v231
    %v904 = vunpack.c.l.b16 %v232
    %v905 = vunpack.c.h.b16 %v232
    %v906 = vunpack.c.l.b16 %v233
    %v907 = vunpack.c.h.b16 %v233
    %v908 = vunpack.c.l.b16 %v234
    %v909 = vunpack.c.h.b16 %v234
    %v910 = vunpack.c.l.b16 %v235
    %v911 = vunpack.c.h.b16 %v235
    %v912 = vunpack.c.l.b16 %v236
    %v913 = vunpack.c.h.b16 %v236
    %v914 = vunpack.c.l.b16 %v237
    %v915 = vunpack.c.h.b16 %v237
    %v916 = vunpack.c.l.b16 %v238
    %v917 = vunpack.c.h.b16 %v238
    %v918 = vunpack.c.l.b16 %v239
    %v919 = vunpack.c.h.b16 %v239
    %v920 = vunpack.c.l.b16 %v240
    %v921 = vunpack.c.h.b16 %v240
    %v922 = vunpack.c.l.b16 %v241
    %v923 = vunpack.c.h.b16 %v241
    %v924 = vunpack.c.l.b16 %v242
    %v925 = vunpack.c.h.b16 %v242
    %v926 = vunpack.c.l.b16 %v243
    %v927 = vunpack.c.h.b16 %v243
    %v928 = vunpack.c.l.b16 %v244
    %v929 = vunpack.c.h.b16 %v244
    %v930 = vunpack.c.l.b16 %v245
    %v931 = vunpack.c.h.b16 %v245
    %v932 = vunpack.c.l.b16 %v246
    %v933 = vunpack.c.h.b16 %v246
    %v934 = vunpack.c.l.b16 %v247
    %v935 = vunpack.c.h.b16 %v247
    %v936 = vunpack.c.l.b16 %v248
    %v937 = vunpack.c.h.b16 %v248
    %v938 = vunpack.c.l.b16 %v249
    %v939 = vunpack.c.h.b16 %v249
    %v940 = vunpack.c.l.b16 %v250
    %v941 = vunpack.c.h.b16 %v250
    %v942 = vunpack.c.l.b16 %v251
    %v943 = vunpack.c.h.b16 %v251
    %v944 = vunpack.c.l.b16 %v252
    %v945 = vunpack.c.h.b16 %v252
    %v946 = vunpack.c.l.b16 %v253
    %v947 = vunpack.c.h.b16 %v253
    %v948 = vunpack.c.l.b16 %v254
    %v949 = vunpack.c.h.b16 %v254
    %v950 = vunpack.c.l.b16 %v255
    %v951 = vunpack.c.h.b16 %v255
    %v952 = vunpack.c.l.b16 %v256
    %v953 = vunpack.c.h.b16 %v256
    %v954 = vunpack.c.l.b16 %v257
    %v955 = vunpack.c.h.b16 %v257
    %v956 = vunpack.c.l.b16 %v258
    %v957 = vunpack.c.h.b16 %v258
    %v958 = vunpack.c.l.b16 %v259
    %v959 = vunpack.c.h.b16 %v259
    %v960 = vunpack.c.l.b16 %v260
    %v961 = vunpack.c.h.b16 %v260
    %v962 = vunpack.c.l.b16 %v261
    %v963 = vunpack.c.h.b16 %v261
    %v964 = vunpack.c.l.b16 %v262
    %v965 = vunpack.c.h.b16 %v262
    %v966 = vunpack.c.l.b16 %v263
    %v967 = vunpack.c.h.b16 %v263
    %v968 = vunpack.c.l.b16 %v264
    %v969 = vunpack.c.h.b16 %v264
    %v970 = vunpack.c.l.b16 %v265
    %v971 = vunpack.c.h.b16 %v265
    %v972 = vunpack.c.l.b16 %v266
    %v973 = vunpack.c.h.b16 %v266
    %v974 = vunpack.c.l.b16 %v267
    %v975 = vunpack.c.h.b16 %v267
    %v976 = vunpack.c.l.b16 %v268
    %v977 = vunpack.c.h.b16 %v268
    %v978 = vunpack.c.l.b16 %v269
    %v979 = vunpack.c.h.b16 %v269
    %v980 = vunpack.c.l.b16 %v270
    %v981 = vunpack.c.h.b16 %v270
    %v982 = vunpack.c.l.b16 %v271
    %v983 = vunpack.c.h.b16 %v271
    %v984 = vunpack.c.l.b16 %v272
    %v985 = vunpack.c.h.b16 %v272
    %v986 = vunpack.c.l.b16 %v273
    %v987 = vunpack.c.h.b16 %v273
    %v988 = vunpack.c.l.b16 %v274
    %v989 = vunpack.c.h.b16 %v274
    %v990 = vunpack.c.l.b16 %v275
    %v991 = vunpack.c.h.b16 %v275
    %v992 = vunpack.c.l.b16 %v276
    %v993 = vunpack.c.h.b16 %v276
    %v994 = vunpack.c.l.b16 %v277
    %v995 = vunpack.c.h.b16 %v277
    %v996 = vunpack.c.l.b16 %v278
    %v997 = vunpack.c.h.b16 %v278
    %v998 = vunpack.c.l.b16 %v279
    %v999 = vunpack.c.h.b16 %v279
    %v1000 = vunpack.c.l.b16 %v280
    %v1001 = vunpack.c.h.b16 %v280
    %v1002 = vunpack.c.l.b16 %v281
    %v1003 = vunpack.c.h.b16 %v281
    %v1004 = vunpack.c.l.b16 %v282
    %v1005 = vunpack.c.h.b16 %v282
    %v1006 = vunpack.c.l.b16 %v283
    %v1007 = vunpack.c.h.b16 %v283
    %v1008 = vunpack.c.l.b16 %v284
    %v1009 = vunpack.c.h.b16 %v284
    %v1010 = vunpack.c.l.b16 %v285
    %v1011 = vunpack.c.h.b16 %v285
    %v1012 = vunpack.c.l.b16 %v286
    %v1013 = vunpack.c.h.b16 %v286
    %v1014 = vunpack.c.l.b16 %v287
    %v1015 = vunpack.c.h.b16 %v287
    %v1016 = vunpack.c.l.b16 %v288
    %v1017 = vunpack.c.h.b16 %v288
    %v1018 = vunpack.c.l.b16 %v289
    %v1019 = vunpack.c.h.b16 %v289
    %v1020 = vunpack.c.l.b16 %v290
    %v1021 = vunpack.c.h.b16 %v290
    %v1022 = vunpack.c.l.b16 %v291
    %v1023 = vunpack.c.h.b16 %v291
    %v1024 = vunpack.c.l.b16 %v292
    %v1025 = vunpack.c.h.b16 %v292
    %v1026 = vunpack.c.l.b16 %v293
    %v1027 = vunpack.c.h.b16 %v293
    %v1028 = vunpack.c.l.b16 %v294
    %v1029 = vunpack.c.h.b16 %v294
    %v1030 = vunpack.c.l.b16 %v295
    %v1031 = vunpack.c.h.b16 %v295
    %v1032 = vunpack.c.l.b16 %v296
    %v1033 = vunpack.c.h.b16 %v296
    %v1034 = vunpack.c.l.b16 %v297
    %v1035 = vunpack.c.h.b16 %v297
    %v1036 = vunpack.c.l.b16 %v298
    %v1037 = vunpack.c.h.b16 %v298
    %v1038 = vunpack.c.l.b16 %v299
    %v1039 = vunpack.c.h.b16 %v299
    %v1040 = vunpack.c.l.b16 %v300
    %v1041 = vunpack.c.h.b16 %v300
    %v1042 = vunpack.c.l.b16 %v301
    %v1043 = vunpack.c.h.b16 %v301
    %v1044 = vunpack.c.l.b16 %v302
    %v1045 = vunpack.c.h.b16 %v302
    %v1046 = vunpack.c.l.b16 %v303
    %v1047 = vunpack.c.h.b16 %v303
    %v1048 = vunpack.c.l.b16 %v304
    %v1049 = vunpack.c.h.b16 %v304
    %v1050 = vunpack.c.l.b16 %v305
    %v1051 = vunpack.c.h.b16 %v305
    %v1052 = vunpack.c.l.b16 %v306
    %v1053 = vunpack.c.h.b16 %v306
    %v1054 = vunpack.c.l.b16 %v307
    %v1055 = vunpack.c.h.b16 %v307
    %v1056 = vunpack.c.l.b16 %v308
    %v1057 = vunpack.c.h.b16 %v308
    %v1058 = vunpack.c.l.b16 %v309
    %v1059 = vunpack.c.h.b16 %v309
    %v1060 = vunpack.c.l.b16 %v310
    %v1061 = vunpack.c.h.b16 %v310
    %v1062 = vunpack.c.l.b16 %v311
    %v1063 = vunpack.c.h.b16 %v311
    %v1064 = vunpack.c.l.b16 %v312
    %v1065 = vunpack.c.h.b16 %v312
    %v1066 = vunpack.c.l.b16 %v313
    %v1067 = vunpack.c.h.b16 %v313
    %v1068 = vunpack.c.l.b16 %v314
    %v1069 = vunpack.c.h.b16 %v314
    %v1070 = vunpack.c.l.b16 %v315
    %v1071 = vunpack.c.h.b16 %v315
    %v1072 = vunpack.c.l.b16 %v316
    %v1073 = vunpack.c.h.b16 %v316
    %v1074 = vunpack.c.l.b16 %v317
    %v1075 = vunpack.c.h.b16 %v317
    %v1076 = vunpack.c.l.b16 %v318
    %v1077 = vunpack.c.h.b16 %v318
    %v1078 = vunpack.c.l.b16 %v319
    %v1079 = vunpack.c.h.b16 %v319
    %v1080 = vunpack.c.l.b16 %v320
    %v1081 = vunpack.c.h.b16 %v320
    %v1082 = vunpack.c.l.b16 %v321
    %v1083 = vunpack.c.h.b16 %v321
    %v1084 = vunpack.c.l.b16 %v322
    %v1085 = vunpack.c.h.b16 %v322
    %v1086 = vunpack.c.l.b16 %v323
    %v1087 = vunpack.c.h.b16 %v323
    %v1088 = vunpack.c.l.b16 %v324
    %v1089 = vunpack.c.h.b16 %v324
    %v1090 = vunpack.c.l.b16 %v325
    %v1091 = vunpack.c.h.b16 %v325
    %v1092 = vunpack.c.l.b16 %v326
    %v1093 = vunpack.c.h.b16 %v326
    %v1094 = vunpack.c.l.b16 %v327
    %v1095 = vunpack.c.h.b16 %v327
    %v1096 = vunpack.c.l.b16 %v328
    %v1097 = vunpack.c.h.b16 %v328
    %v1098 = vunpack.c.l.b16 %v329
    %v1099 = vunpack.c.h.b16 %v329
    %v1100 = vunpack.c.l.b16 %v330
    %v1101 = vunpack.c.h.b16 %v330
    %v1102 = vunpack.c.l.b16 %v331
    %v1103 = vunpack.c.h.b16 %v331
    %v1104 = vunpack.c.l.b16 %v332
    %v1105 = vunpack.c.h.b16 %v332
    %v1106 = vunpack.c.l.b16 %v333
    %v1107 = vunpack.c.h.b16 %v333
    %v1108 = vunpack.c.l.b16 %v334
    %v1109 = vunpack.c.h.b16 %v334
    %v1110 = vunpack.c.l.b16 %v335
    %v1111 = vunpack.c.h.b16 %v335
    %v1112 = vunpack.c.l.b16 %v336
    %v1113 = vunpack.c.h.b16 %v336
    %v1114 = vunpack.c.l.b16 %v337
    %v1115 = vunpack.c.h.b16 %v337
    %v1116 = vunpack.c.l.b16 %v338
    %v1117 = vunpack.c.h.b16 %v338
    %v1118 = vunpack.c.l.b16 %v339
    %v1119 = vunpack.c.h.b16 %v339
    %v1120 = vunpack.c.l.b16 %v340
    %v1121 = vunpack.c.h.b16 %v340
    %v1122 = vunpack.c.l.b16 %v341
    %v1123 = vunpack.c.h.b16 %v341
    %v1124 = vunpack.c.l.b16 %v342
    %v1125 = vunpack.c.h.b16 %v342
    %v1126 = vunpack.c.l.b16 %v343
    %v1127 = vunpack.c.h.b16 %v343
    %v1128 = vunpack.c.l.b16 %v344
    %v1129 = vunpack.c.h.b16 %v344
    %v1130 = vunpack.c.l.b16 %v345
    %v1131 = vunpack.c.h.b16 %v345
    %v1132 = vunpack.c.l.b16 %v346
    %v1133 = vunpack.c.h.b16 %v346
    %v1134 = vunpack.c.l.b16 %v347
    %v1135 = vunpack.c.h.b16 %v347
    %v1136 = vunpack.c.l.b16 %v348
    %v1137 = vunpack.c.h.b16 %v348
    %v1138 = vunpack.c.l.b16 %v349
    %v1139 = vunpack.c.h.b16 %v349
    %v1140 = vpack.c.b16 %v632, %v628
    %v1141 = vpack.c.b16 %v633, %v629
    %v1142 = vpack.c.b16 %v634, %v630
    %v1143 = vpack.c.b16 %v635, %v631
    %v1144 = vpack.c.b16 %v640, %v636
    %v1145 = vpack.c.b16 %v641, %v637
    %v1146 = vpack.c.b16 %v642, %v638
    %v1147 = vpack.c.b16 %v643, %v639
    %v1148 = vpack.c.b16 %v648, %v644
    %v1149 = vpack.c.b16 %v649, %v645
    %v1150 = vpack.c.b16 %v650, %v646
    %v1151 = vpack.c.b16 %v651, %v647
    %v1152 = vpack.c.b16 %v656, %v652
    %v1153 = vpack.c.b16 %v657, %v653
    %v1154 = vpack.c.b16 %v658, %v654
    %v1155 = vpack.c.b16 %v659, %v655
    %v1156 = vpack.c.b16 %v664, %v660
    %v1157 = vpack.c.b16 %v665, %v661
    %v1158 = vpack.c.b16 %v666, %v662
    %v1159 = vpack.c.b16 %v667, %v663
    %v1160 = vpack.c.b16 %v672, %v668
    %v1161 = vpack.c.b16 %v673, %v669
    %v1162 = vpack.c.b16 %v674, %v670
    %v1163 = vpack.c.b16 %v675, %v671
    %v1164 = vpack.c.b16 %v680, %v676
    %v1165 = vpack.c.b16 %v681, %v677
    %v1166 = vpack.c.b16 %v682, %v678
    %v1167 = vpack.c.b16 %v683, %v679
    %v1168 = vpack.c.b16 %v688, %v684
    %v1169 = vpack.c.b16 %v689, %v685
    %v1170 = vpack.c.b16 %v690, %v686
    %v1171 = vpack.c.b16 %v691, %v687
    %v1172 = vpack.c.b16 %v696, %v692
    %v1173 = vpack.c.b16 %v697, %v693
    %v1174 = vpack.c.b16 %v698, %v694
    %v1175 = vpack.c.b16 %v699, %v695
    %v1176 = vpack.c.b16 %v704, %v700
    %v1177 = vpack.c.b16 %v705, %v701
    %v1178 = vpack.c.b16 %v706, %v702
    %v1179 = vpack.c.b16 %v707, %v703
    %v1180 = vpack.c.b16 %v712, %v708
    %v1181 = vpack.c.b16 %v713, %v709
    %v1182 = vpack.c.b16 %v714, %v710
    %v1183 = vpack.c.b16 %v715, %v711
    %v1184 = vpack.c.b16 %v720, %v716
    %v1185 = vpack.c.b16 %v721, %v717
    %v1186 = vpack.c.b16 %v722, %v718
    %v1187 = vpack.c.b16 %v723, %v719
    %v1188 = vpack.c.b16 %v728, %v724
    %v1189 = vpack.c.b16 %v729, %v725
    %v1190 = vpack.c.b16 %v730, %v726
    %v1191 = vpack.c.b16 %v731, %v727
    %v1192 = vpack.c.b16 %v736, %v732
    %v1193 = vpack.c.b16 %v737, %v733
    %v1194 = vpack.c.b16 %v738, %v734
    %v1195 = vpack.c.b16 %v739, %v735
    %v1196 = vpack.c.b16 %v744, %v740
    %v1197 = vpack.c.b16 %v745, %v741
    %v1198 = vpack.c.b16 %v746, %v742
    %v1199 = vpack.c.b16 %v747, %v743
    %v1200 = vpack.c.b16 %v752, %v748
    %v1201 = vpack.c.b16 %v753, %v749
    %v1202 = vpack.c.b16 %v754, %v750
    %v1203 = vpack.c.b16 %v755, %v751
    %v1204 = vpack.c.b16 %v760, %v756
    %v1205 = vpack.c.b16 %v761, %v757
    %v1206 = vpack.c.b16 %v762, %v758
    %v1207 = vpack.c.b16 %v763, %v759
    %v1208 = vpack.c.b16 %v768, %v764
    %v1209 = vpack.c.b16 %v769, %v765
    %v1210 = vpack.c.b16 %v770, %v766
    %v1211 = vpack.c.b16 %v771, %v767
    %v1212 = vpack.c.b16 %v776, %v772
    %v1213 = vpack.c.b16 %v777, %v773
    %v1214 = vpack.c.b16 %v778, %v774
    %v1215 = vpack.c.b16 %v779, %v775
    %v1216 = vpack.c.b16 %v784, %v780
    %v1217 = vpack.c.b16 %v785, %v781
    %v1218 = vpack.c.b16 %v786, %v782
    %v1219 = vpack.c.b16 %v787, %v783
    %v1220 = vpack.c.b16 %v792, %v788
    %v1221 = vpack.c.b16 %v793, %v789
    %v1222 = vpack.c.b16 %v794, %v790
    %v1223 = vpack.c.b16 %v795, %v791
    %v1224 = vpack.c.b16 %v800, %v796
    %v1225 = vpack.c.b16 %v801, %v797
    %v1226 = vpack.c.b16 %v802, %v798
    %v1227 = vpack.c.b16 %v803, %v799
    %v1228 = vpack.c.b16 %v808, %v804
    %v1229 = vpack.c.b16 %v809, %v805
    %v1230 = vpack.c.b16 %v810, %v806
    %v1231 = vpack.c.b16 %v811, %v807
    %v1232 = vpack.c.b16 %v816, %v812
    %v1233 = vpack.c.b16 %v817, %v813
    %v1234 = vpack.c.b16 %v818, %v814
    %v1235 = vpack.c.b16 %v819, %v815
    %v1236 = vpack.c.b16 %v824, %v820
    %v1237 = vpack.c.b16 %v825, %v821
    %v1238 = vpack.c.b16 %v826, %v822
    %v1239 = vpack.c.b16 %v827, %v823
    %v1240 = vpack.c.b16 %v832, %v828
    %v1241 = vpack.c.b16 %v833, %v829
    %v1242 = vpack.c.b16 %v834, %v830
    %v1243 = vpack.c.b16 %v835, %v831
    %v1244 = vpack.c.b16 %v840, %v836
    %v1245 = vpack.c.b16 %v841, %v837
    %v1246 = vpack.c.b16 %v842, %v838
    %v1247 = vpack.c.b16 %v843, %v839
    %v1248 = vpack.c.b16 %v848, %v844
    %v1249 = vpack.c.b16 %v849, %v845
    %v1250 = vpack.c.b16 %v850, %v846
    %v1251 = vpack.c.b16 %v851, %v847
    %v1252 = vpack.c.b16 %v856, %v852
    %v1253 = vpack.c.b16 %v857, %v853
    %v1254 = vpack.c.b16 %v858, %v854
    %v1255 = vpack.c.b16 %v859, %v855
    %v1256 = vpack.c.b16 %v864, %v860
    %v1257 = vpack.c.b16 %v865, %v861
    %v1258 = vpack.c.b16 %v866, %v862
    %v1259 = vpack.c.b16 %v867, %v863
    %v1260 = vpack.c.b16 %v872, %v868
    %v1261 = vpack.c.b16 %v873, %v869
    %v1262 = vpack.c.b16 %v874, %v870
    %v1263 = vpack.c.b16 %v875, %v871
    %v1264 = vpack.c.b16 %v880, %v876
    %v1265 = vpack.c.b16 %v881, %v877
    %v1266 = vpack.c.b16 %v882, %v878
    %v1267 = vpack.c.b16 %v883, %v879
    %v1268 = vpack.c.b16 %v888, %v884
    %v1269 = vpack.c.b16 %v889, %v885
    %v1270 = vpack.c.b16 %v890, %v886
    %v1271 = vpack.c.b16 %v891, %v887
    %v1272 = vpack.c.b16 %v896, %v892
    %v1273 = vpack.c.b16 %v897, %v893
    %v1274 = vpack.c.b16 %v898, %v894
    %v1275 = vpack.c.b16 %v899, %v895
    %v1276 = vpack.c.b16 %v904, %v900
    %v1277 = vpack.c.b16 %v905, %v901
    %v1278 = vpack.c.b16 %v906, %v902
    %v1279 = vpack.c.b16 %v907, %v903
    %v1280 = vpack.c.b16 %v912, %v908
    %v1281 = vpack.c.b16 %v913, %v909
    %v1282 = vpack.c.b16 %v914, %v910
    %v1283 = vpack.c.b16 %v915, %v911
    %v1284 = vpack.c.b16 %v920, %v916
    %v1285 = vpack.c.b16 %v921, %v917
    %v1286 = vpack.c.b16 %v922, %v918
    %v1287 = vpack.c.b16 %v923, %v919
    %v1288 = vpack.c.b16 %v928, %v924
    %v1289 = vpack.c.b16 %v929, %v925
    %v1290 = vpack.c.b16 %v930, %v926
    %v1291 = vpack.c.b16 %v931, %v927
    %v1292 = vpack.c.b16 %v936, %v932
    %v1293 = vpack.c.b16 %v937, %v933
    %v1294 = vpack.c.b16 %v938, %v934
    %v1295 = vpack.c.b16 %v939, %v935
    %v1296 = vpack.c.b16 %v944, %v940
    %v1297 = vpack.c.b16 %v945, %v941
    %v1298 = vpack.c.b16 %v946, %v942
    %v1299 = vpack.c.b16 %v947, %v943
    %v1300 = vpack.c.b16 %v952, %v948
    %v1301 = vpack.c.b16 %v953, %v949
    %v1302 = vpack.c.b16 %v954, %v950
    %v1303 = vpack.c.b16 %v955, %v951
    %v1304 = vpack.c.b16 %v960, %v956
    %v1305 = vpack.c.b16 %v961, %v957
    %v1306 = vpack.c.b16 %v962, %v958
    %v1307 = vpack.c.b16 %v963, %v959
    %v1308 = vpack.c.b16 %v968, %v964
    %v1309 = vpack.c.b16 %v969, %v965
    %v1310 = vpack.c.b16 %v970, %v966
    %v1311 = vpack.c.b16 %v971, %v967
    %v1312 = vpack.c.b16 %v976, %v972
    %v1313 = vpack.c.b16 %v977, %v973
    %v1314 = vpack.c.b16 %v978, %v974
    %v1315 = vpack.c.b16 %v979, %v975
    %v1316 = vpack.c.b16 %v984, %v980
    %v1317 = vpack.c.b16 %v985, %v981
    %v1318 = vpack.c.b16 %v986, %v982
    %v1319 = vpack.c.b16 %v987, %v983
    %v1320 = vpack.c.b16 %v992, %v988
    %v1321 = vpack.c.b16 %v993, %v989
    %v1322 = vpack.c.b16 %v994, %v990
    %v1323 = vpack.c.b16 %v995, %v991
    %v1324 = vpack.c.b16 %v1000, %v996
    %v1325 = vpack.c.b16 %v1001, %v997
    %v1326 = vpack.c.b16 %v1002, %v998
    %v1327 = vpack.c.b16 %v1003, %v999
    %v1328 = vpack.c.b16 %v1008, %v1004
    %v1329 = vpack.c.b16 %v1009, %v1005
    %v1330 = vpack.c.b16 %v1010, %v1006
    %v1331 = vpack.c.b16 %v1011, %v1007
    %v1332 = vpack.c.b16 %v1016, %v1012
    %v1333 = vpack.c.b16 %v1017, %v1013
    %v1334 = vpack.c.b16 %v1018, %v1014
    %v1335 = vpack.c.b16 %v1019, %v1015
    %v1336 = vpack.c.b16 %v1024, %v1020
    %v1337 = vpack.c.b16 %v1025, %v1021
    %v1338 = vpack.c.b16 %v1026, %v1022
    %v1339 = vpack.c.b16 %v1027, %v1023
    %v1340 = vpack.c.b16 %v1032, %v1028
    %v1341 = vpack.c.b16 %v1033, %v1029
    %v1342 = vpack.c.b16 %v1034, %v1030
    %v1343 = vpack.c.b16 %v1035, %v1031
    %v1344 = vpack.c.b16 %v1040, %v1036
    %v1345 = vpack.c.b16 %v1041, %v1037
    %v1346 = vpack.c.b16 %v1042, %v1038
    %v1347 = vpack.c.b16 %v1043, %v1039
    %v1348 = vpack.c.b16 %v1048, %v1044
    %v1349 = vpack.c.b16 %v1049, %v1045
    %v1350 = vpack.c.b16 %v1050, %v1046
    %v1351 = vpack.c.b16 %v1051, %v1047
    %v1352 = vpack.c.b16 %v1056, %v1052
    %v1353 = vpack.c.b16 %v1057, %v1053
    %v1354 = vpack.c.b16 %v1058, %v1054
    %v1355 = vpack.c.b16 %v1059, %v1055
    %v1356 = vpack.c.b16 %v1064, %v1060
    %v1357 = vpack.c.b16 %v1065, %v1061
    %v1358 = vpack.c.b16 %v1066, %v1062
    %v1359 = vpack.c.b16 %v1067, %v1063
    %v1360 = vpack.c.b16 %v1072, %v1068
    %v1361 = vpack.c.b16 %v1073, %v1069
    %v1362 = vpack.c.b16 %v1074, %v1070
    %v1363 = vpack.c.b16 %v1075, %v1071
    %v1364 = vpack.c.b16 %v1080, %v1076
    %v1365 = vpack.c.b16 %v1081, %v1077
    %v1366 = vpack.c.b16 %v1082, %v1078
    %v1367 = vpack.c.b16 %v1083, %v1079
    %v1368 = vpack.c.b16 %v1088, %v1084
    %v1369 = vpack.c.b16 %v1089, %v1085
    %v1370 = vpack.c.b16 %v1090, %v1086
    %v1371 = vpack.c.b16 %v1091, %v1087
    %v1372 = vpack.c.b16 %v1096, %v1092
    %v1373 = vpack.c.b16 %v1097, %v1093
    %v1374 = vpack.c.b16 %v1098, %v1094
    %v1375 = vpack.c.b16 %v1099, %v1095
    %v1376 = vpack.c.b16 %v1104, %v1100
    %v1377 = vpack.c.b16 %v1105, %v1101
    %v1378 = vpack.c.b16 %v1106, %v1102
    %v1379 = vpack.c.b16 %v1107, %v1103
    %v1380 = vpack.c.b16 %v1112, %v1108
    %v1381 = vpack.c.b16 %v1113, %v1109
    %v1382 = vpack.c.b16 %v1114, %v1110
    %v1383 = vpack.c.b16 %v1115, %v1111
    %v1384 = vpack.c.b16 %v1120, %v1116
    %v1385 = vpack.c.b16 %v1121, %v1117
    %v1386 = vpack.c.b16 %v1122, %v1118
    %v1387 = vpack.c.b16 %v1123, %v1119
    %v1388 = vpack.c.b16 %v1128, %v1124
    %v1389 = vpack.c.b16 %v1129, %v1125
    %v1390 = vpack.c.b16 %v1130, %v1126
    %v1391 = vpack.c.b16 %v1131, %v1127
    %v1392 = vpack.c.b16 %v1136, %v1132
    %v1393 = vpack.c.b16 %v1137, %v1133
    %v1394 = vpack.c.b16 %v1138, %v1134
    %v1395 = vpack.c.b16 %v1139, %v1135
    %1652 = vmatprep.subr.bf16.mxu0 %v1141
    %1653 = vmatpush1.bf16.msra.mxu0 %v1140
    %1654 = vmatprep.subr.bf16.mxu0 %v1145
    %1655 = vmatpush1.bf16.msra.mxu0 %v1144
    %1656 = vmatprep.subr.bf16.mxu0 %v1149
    %1657 = vmatpush1.bf16.msra.mxu0 %v1148
    %1658 = vmatprep.subr.bf16.mxu0 %v1153
    %1659 = vmatpush1.bf16.msra.mxu0 %v1152
    %1660 = vmatprep.subr.bf16.mxu0 %v1157
    %1661 = vmatpush1.bf16.msra.mxu0 %v1156
    %1662 = vmatprep.subr.bf16.mxu0 %v1161
    %1663 = vmatpush1.bf16.msra.mxu0 %v1160
    %1664 = vmatprep.subr.bf16.mxu0 %v1165
    %1665 = vmatpush1.bf16.msra.mxu0 %v1164
    %1666 = vmatprep.subr.bf16.mxu0 %v1169
    %1667 = vmatpush1.bf16.msra.mxu0 %v1168
    %1668 = vmatprep.subr.bf16.mxu0 %v1173
    %1669 = vmatpush1.bf16.msra.mxu0 %v1172
    %1670 = vmatprep.subr.bf16.mxu0 %v1177
    %1671 = vmatpush1.bf16.msra.mxu0 %v1176
    %1672 = vmatprep.subr.bf16.mxu0 %v1181
    %1673 = vmatpush1.bf16.msra.mxu0 %v1180
    %1674 = vmatprep.subr.bf16.mxu0 %v1185
    %1675 = vmatpush1.bf16.msra.mxu0 %v1184
    %1676 = vmatprep.subr.bf16.mxu0 %v1189
    %1677 = vmatpush1.bf16.msra.mxu0 %v1188
    %1678 = vmatprep.subr.bf16.mxu0 %v1193
    %1679 = vmatpush1.bf16.msra.mxu0 %v1192
    %1680 = vmatprep.subr.bf16.mxu0 %v1197
    %1681 = vmatpush1.bf16.msra.mxu0 %v1196
    %1682 = vmatprep.subr.bf16.mxu0 %v1201
    %1683 = vmatpush1.bf16.msra.mxu0 %v1200
    %1684 = vmatprep.mubr.bf16.mxu0 %v87
    %1685 = vmatmul.mubr.bf16.gmra.mrb[0].mxu0 %v86
    %v1686 = vpop.f32.mrb[0].mxu0
    %v1687 = vadd.f32 %v355, %v1686
    %v1688 = vpop.f32.mrb[0].mxu0
    %v1689 = vadd.f32 %v359, %v1688
    %v1690 = vpop.f32.mrb[0].mxu0
    %v1691 = vpop.f32.mrb[0].mxu0
    %1692 = vdwg.mxu0
    %1693 = vmatprep.subr.bf16.mxu0 %v1205
    %1694 = vmatpush1.bf16.msra.mxu0 %v1204
    %1695 = vmatprep.subr.bf16.mxu0 %v1209
    %1696 = vmatpush1.bf16.msra.mxu0 %v1208
    %1697 = vmatprep.subr.bf16.mxu0 %v1213
    %1698 = vmatpush1.bf16.msra.mxu0 %v1212
    %1699 = vmatprep.subr.bf16.mxu0 %v1217
    %1700 = vmatpush1.bf16.msra.mxu0 %v1216
    %1701 = vmatprep.subr.bf16.mxu0 %v1221
    %1702 = vmatpush1.bf16.msra.mxu0 %v1220
    %1703 = vmatprep.subr.bf16.mxu0 %v1225
    %1704 = vmatpush1.bf16.msra.mxu0 %v1224
    %1705 = vmatprep.subr.bf16.mxu0 %v1229
    %1706 = vmatpush1.bf16.msra.mxu0 %v1228
    %1707 = vmatprep.subr.bf16.mxu0 %v1233
    %1708 = vmatpush1.bf16.msra.mxu0 %v1232
    %1709 = vmatprep.subr.bf16.mxu0 %v1237
    %1710 = vmatpush1.bf16.msra.mxu0 %v1236
    %1711 = vmatprep.subr.bf16.mxu0 %v1241
    %1712 = vmatpush1.bf16.msra.mxu0 %v1240
    %1713 = vmatprep.subr.bf16.mxu0 %v1245
    %1714 = vmatpush1.bf16.msra.mxu0 %v1244
    %1715 = vmatprep.subr.bf16.mxu0 %v1249
    %1716 = vmatpush1.bf16.msra.mxu0 %v1248
    %1717 = vmatprep.subr.bf16.mxu0 %v1253
    %1718 = vmatpush1.bf16.msra.mxu0 %v1252
    %1719 = vmatprep.subr.bf16.mxu0 %v1257
    %1720 = vmatpush1.bf16.msra.mxu0 %v1256
    %1721 = vmatprep.subr.bf16.mxu0 %v1261
    %1722 = vmatpush1.bf16.msra.mxu0 %v1260
    %1723 = vmatprep.subr.bf16.mxu0 %v1265
    %1724 = vmatpush1.bf16.msra.mxu0 %v1264
    %1725 = vmatprep.mubr.bf16.mxu0 %v89
    %1726 = vmatmul.mubr.bf16.gmra.mrb[0].mxu0 %v88
    %v1727 = vpop.f32.mrb[0].mxu0
    %v1728 = vadd.f32 %v1687, %v1727
    %v1729 = vpop.f32.mrb[0].mxu0
    %v1730 = vadd.f32 %v1689, %v1729
    %v1731 = vpop.f32.mrb[0].mxu0
    %v1732 = vpop.f32.mrb[0].mxu0
    %1733 = vdwg.mxu0
    %1734 = vmatprep.subr.bf16.mxu0 %v1269
    %1735 = vmatpush1.bf16.msra.mxu0 %v1268
    %1736 = vmatprep.subr.bf16.mxu0 %v1273
    %1737 = vmatpush1.bf16.msra.mxu0 %v1272
    %1738 = vmatprep.subr.bf16.mxu0 %v1277
    %1739 = vmatpush1.bf16.msra.mxu0 %v1276
    %1740 = vmatprep.subr.bf16.mxu0 %v1281
    %1741 = vmatpush1.bf16.msra.mxu0 %v1280
    %1742 = vmatprep.subr.bf16.mxu0 %v1285
    %1743 = vmatpush1.bf16.msra.mxu0 %v1284
    %1744 = vmatprep.subr.bf16.mxu0 %v1289
    %1745 = vmatpush1.bf16.msra.mxu0 %v1288
    %1746 = vmatprep.subr.bf16.mxu0 %v1293
    %1747 = vmatpush1.bf16.msra.mxu0 %v1292
    %1748 = vmatprep.subr.bf16.mxu0 %v1297
    %1749 = vmatpush1.bf16.msra.mxu0 %v1296
    %1750 = vmatprep.subr.bf16.mxu0 %v1301
    %1751 = vmatpush1.bf16.msra.mxu0 %v1300
    %1752 = vmatprep.subr.bf16.mxu0 %v1305
    %1753 = vmatpush1.bf16.msra.mxu0 %v1304
    %1754 = vmatprep.subr.bf16.mxu0 %v1309
    %1755 = vmatpush1.bf16.msra.mxu0 %v1308
    %1756 = vmatprep.subr.bf16.mxu0 %v1313
    %1757 = vmatpush1.bf16.msra.mxu0 %v1312
    %1758 = vmatprep.subr.bf16.mxu0 %v1317
    %1759 = vmatpush1.bf16.msra.mxu0 %v1316
    %1760 = vmatprep.subr.bf16.mxu0 %v1321
    %1761 = vmatpush1.bf16.msra.mxu0 %v1320
    %1762 = vmatprep.subr.bf16.mxu0 %v1325
    %1763 = vmatpush1.bf16.msra.mxu0 %v1324
    %1764 = vmatprep.subr.bf16.mxu0 %v1329
    %1765 = vmatpush1.bf16.msra.mxu0 %v1328
    %1766 = vmatprep.mubr.bf16.mxu0 %v91
    %1767 = vmatmul.mubr.bf16.gmra.mrb[0].mxu0 %v90
    %v1768 = vpop.f32.mrb[0].mxu0
    %v1769 = vadd.f32 %v1728, %v1768
    %v1770 = vpop.f32.mrb[0].mxu0
    %v1771 = vadd.f32 %v1730, %v1770
    %v1772 = vpop.f32.mrb[0].mxu0
    %v1773 = vpop.f32.mrb[0].mxu0
    %1774 = vdwg.mxu0
    %1775 = vmatprep.subr.bf16.mxu0 %v1333
    %1776 = vmatpush1.bf16.msra.mxu0 %v1332
    %1777 = vmatprep.subr.bf16.mxu0 %v1337
    %1778 = vmatpush1.bf16.msra.mxu0 %v1336
    %1779 = vmatprep.subr.bf16.mxu0 %v1341
    %1780 = vmatpush1.bf16.msra.mxu0 %v1340
    %1781 = vmatprep.subr.bf16.mxu0 %v1345
    %1782 = vmatpush1.bf16.msra.mxu0 %v1344
    %1783 = vmatprep.subr.bf16.mxu0 %v1349
    %1784 = vmatpush1.bf16.msra.mxu0 %v1348
    %1785 = vmatprep.subr.bf16.mxu0 %v1353
    %1786 = vmatpush1.bf16.msra.mxu0 %v1352
    %1787 = vmatprep.subr.bf16.mxu0 %v1357
    %1788 = vmatpush1.bf16.msra.mxu0 %v1356
    %1789 = vmatprep.subr.bf16.mxu0 %v1361
    %1790 = vmatpush1.bf16.msra.mxu0 %v1360
    %1791 = vmatprep.subr.bf16.mxu0 %v1365
    %1792 = vmatpush1.bf16.msra.mxu0 %v1364
    %1793 = vmatprep.subr.bf16.mxu0 %v1369
    %1794 = vmatpush1.bf16.msra.mxu0 %v1368
    %1795 = vmatprep.subr.bf16.mxu0 %v1373
    %1796 = vmatpush1.bf16.msra.mxu0 %v1372
    %1797 = vmatprep.subr.bf16.mxu0 %v1377
    %1798 = vmatpush1.bf16.msra.mxu0 %v1376
    %1799 = vmatprep.subr.bf16.mxu0 %v1381
    %1800 = vmatpush1.bf16.msra.mxu0 %v1380
    %1801 = vmatprep.subr.bf16.mxu0 %v1385
    %1802 = vmatpush1.bf16.msra.mxu0 %v1384
    %1803 = vmatprep.subr.bf16.mxu0 %v1389
    %1804 = vmatpush1.bf16.msra.mxu0 %v1388
    %1805 = vmatprep.subr.bf16.mxu0 %v1393
    %1806 = vmatpush1.bf16.msra.mxu0 %v1392
    %1807 = vmatprep.mubr.bf16.mxu0 %v93
    %1808 = vmatmul.mubr.bf16.gmra.mrb[0].mxu0 %v92
    %v1809 = vpop.f32.mrb[0].mxu0
    %v1810 = vadd.f32 %v1769, %v1809
    %v1811 = vpop.f32.mrb[0].mxu0
    %v1812 = vadd.f32 %v1771, %v1811
    %v1813 = vpop.f32.mrb[0].mxu0
    %v1814 = vpop.f32.mrb[0].mxu0
    %1815 = vdwg.mxu0
    %1816 = vmatprep.subr.bf16.mxu0 %v1143
    %1817 = vmatpush1.bf16.msra.mxu0 %v1142
    %1818 = vmatprep.subr.bf16.mxu0 %v1147
    %1819 = vmatpush1.bf16.msra.mxu0 %v1146
    %1820 = vmatprep.subr.bf16.mxu0 %v1151
    %1821 = vmatpush1.bf16.msra.mxu0 %v1150
    %1822 = vmatprep.subr.bf16.mxu0 %v1155
    %1823 = vmatpush1.bf16.msra.mxu0 %v1154
    %1824 = vmatprep.subr.bf16.mxu0 %v1159
    %1825 = vmatpush1.bf16.msra.mxu0 %v1158
    %1826 = vmatprep.subr.bf16.mxu0 %v1163
    %1827 = vmatpush1.bf16.msra.mxu0 %v1162
    %1828 = vmatprep.subr.bf16.mxu0 %v1167
    %1829 = vmatpush1.bf16.msra.mxu0 %v1166
    %1830 = vmatprep.subr.bf16.mxu0 %v1171
    %1831 = vmatpush1.bf16.msra.mxu0 %v1170
    %1832 = vmatprep.subr.bf16.mxu0 %v1175
    %1833 = vmatpush1.bf16.msra.mxu0 %v1174
    %1834 = vmatprep.subr.bf16.mxu0 %v1179
    %1835 = vmatpush1.bf16.msra.mxu0 %v1178
    %1836 = vmatprep.subr.bf16.mxu0 %v1183
    %1837 = vmatpush1.bf16.msra.mxu0 %v1182
    %1838 = vmatprep.subr.bf16.mxu0 %v1187
    %1839 = vmatpush1.bf16.msra.mxu0 %v1186
    %1840 = vmatprep.subr.bf16.mxu0 %v1191
    %1841 = vmatpush1.bf16.msra.mxu0 %v1190
    %1842 = vmatprep.subr.bf16.mxu0 %v1195
    %1843 = vmatpush1.bf16.msra.mxu0 %v1194
    %1844 = vmatprep.subr.bf16.mxu0 %v1199
    %1845 = vmatpush1.bf16.msra.mxu0 %v1198
    %1846 = vmatprep.subr.bf16.mxu0 %v1203
    %1847 = vmatpush1.bf16.msra.mxu0 %v1202
    %1848 = vmatprep.mubr.bf16.mxu0 %v87
    %1849 = vmatmul.mubr.bf16.gmra.mrb[0].mxu0 %v86
    %v1850 = vpop.f32.mrb[0].mxu0
    %v1851 = vadd.f32 %v363, %v1850
    %v1852 = vpop.f32.mrb[0].mxu0
    %v1853 = vadd.f32 %v367, %v1852
    %v1854 = vpop.f32.mrb[0].mxu0
    %v1855 = vpop.f32.mrb[0].mxu0
    %1856 = vdwg.mxu0
    %1857 = vmatprep.subr.bf16.mxu0 %v1207
    %1858 = vmatpush1.bf16.msra.mxu0 %v1206
    %1859 = vmatprep.subr.bf16.mxu0 %v1211
    %1860 = vmatpush1.bf16.msra.mxu0 %v1210
    %1861 = vmatprep.subr.bf16.mxu0 %v1215
    %1862 = vmatpush1.bf16.msra.mxu0 %v1214
    %1863 = vmatprep.subr.bf16.mxu0 %v1219
    %1864 = vmatpush1.bf16.msra.mxu0 %v1218
    %1865 = vmatprep.subr.bf16.mxu0 %v1223
    %1866 = vmatpush1.bf16.msra.mxu0 %v1222
    %1867 = vmatprep.subr.bf16.mxu0 %v1227
    %1868 = vmatpush1.bf16.msra.mxu0 %v1226
    %1869 = vmatprep.subr.bf16.mxu0 %v1231
    %1870 = vmatpush1.bf16.msra.mxu0 %v1230
    %1871 = vmatprep.subr.bf16.mxu0 %v1235
    %1872 = vmatpush1.bf16.msra.mxu0 %v1234
    %1873 = vmatprep.subr.bf16.mxu0 %v1239
    %1874 = vmatpush1.bf16.msra.mxu0 %v1238
    %1875 = vmatprep.subr.bf16.mxu0 %v1243
    %1876 = vmatpush1.bf16.msra.mxu0 %v1242
    %1877 = vmatprep.subr.bf16.mxu0 %v1247
    %1878 = vmatpush1.bf16.msra.mxu0 %v1246
    %1879 = vmatprep.subr.bf16.mxu0 %v1251
    %1880 = vmatpush1.bf16.msra.mxu0 %v1250
    %1881 = vmatprep.subr.bf16.mxu0 %v1255
    %1882 = vmatpush1.bf16.msra.mxu0 %v1254
    %1883 = vmatprep.subr.bf16.mxu0 %v1259
    %1884 = vmatpush1.bf16.msra.mxu0 %v1258
    %1885 = vmatprep.subr.bf16.mxu0 %v1263
    %1886 = vmatpush1.bf16.msra.mxu0 %v1262
    %1887 = vmatprep.subr.bf16.mxu0 %v1267
    %1888 = vmatpush1.bf16.msra.mxu0 %v1266
    %1889 = vmatprep.mubr.bf16.mxu0 %v89
    %1890 = vmatmul.mubr.bf16.gmra.mrb[0].mxu0 %v88
    %v1891 = vpop.f32.mrb[0].mxu0
    %v1892 = vadd.f32 %v1851, %v1891
    %v1893 = vpop.f32.mrb[0].mxu0
    %v1894 = vadd.f32 %v1853, %v1893
    %v1895 = vpop.f32.mrb[0].mxu0
    %v1896 = vpop.f32.mrb[0].mxu0
    %1897 = vdwg.mxu0
    %1898 = vmatprep.subr.bf16.mxu0 %v1271
    %1899 = vmatpush1.bf16.msra.mxu0 %v1270
    %1900 = vmatprep.subr.bf16.mxu0 %v1275
    %1901 = vmatpush1.bf16.msra.mxu0 %v1274
    %1902 = vmatprep.subr.bf16.mxu0 %v1279
    %1903 = vmatpush1.bf16.msra.mxu0 %v1278
    %1904 = vmatprep.subr.bf16.mxu0 %v1283
    %1905 = vmatpush1.bf16.msra.mxu0 %v1282
    %1906 = vmatprep.subr.bf16.mxu0 %v1287
    %1907 = vmatpush1.bf16.msra.mxu0 %v1286
    %1908 = vmatprep.subr.bf16.mxu0 %v1291
    %1909 = vmatpush1.bf16.msra.mxu0 %v1290
    %1910 = vmatprep.subr.bf16.mxu0 %v1295
    %1911 = vmatpush1.bf16.msra.mxu0 %v1294
    %1912 = vmatprep.subr.bf16.mxu0 %v1299
    %1913 = vmatpush1.bf16.msra.mxu0 %v1298
    %1914 = vmatprep.subr.bf16.mxu0 %v1303
    %1915 = vmatpush1.bf16.msra.mxu0 %v1302
    %1916 = vmatprep.subr.bf16.mxu0 %v1307
    %1917 = vmatpush1.bf16.msra.mxu0 %v1306
    %1918 = vmatprep.subr.bf16.mxu0 %v1311
    %1919 = vmatpush1.bf16.msra.mxu0 %v1310
    %1920 = vmatprep.subr.bf16.mxu0 %v1315
    %1921 = vmatpush1.bf16.msra.mxu0 %v1314
    %1922 = vmatprep.subr.bf16.mxu0 %v1319
    %1923 = vmatpush1.bf16.msra.mxu0 %v1318
    %1924 = vmatprep.subr.bf16.mxu0 %v1323
    %1925 = vmatpush1.bf16.msra.mxu0 %v1322
    %1926 = vmatprep.subr.bf16.mxu0 %v1327
    %1927 = vmatpush1.bf16.msra.mxu0 %v1326
    %1928 = vmatprep.subr.bf16.mxu0 %v1331
    %1929 = vmatpush1.bf16.msra.mxu0 %v1330
    %1930 = vmatprep.mubr.bf16.mxu0 %v91
    %1931 = vmatmul.mubr.bf16.gmra.mrb[0].mxu0 %v90
    %v1932 = vpop.f32.mrb[0].mxu0
    %v1933 = vadd.f32 %v1892, %v1932
    %v1934 = vpop.f32.mrb[0].mxu0
    %v1935 = vadd.f32 %v1894, %v1934
    %v1936 = vpop.f32.mrb[0].mxu0
    %v1937 = vpop.f32.mrb[0].mxu0
    %1938 = vdwg.mxu0
    %1939 = vmatprep.subr.bf16.mxu0 %v1335
    %1940 = vmatpush1.bf16.msra.mxu0 %v1334
    %1941 = vmatprep.subr.bf16.mxu0 %v1339
    %1942 = vmatpush1.bf16.msra.mxu0 %v1338
    %1943 = vmatprep.subr.bf16.mxu0 %v1343
    %1944 = vmatpush1.bf16.msra.mxu0 %v1342
    %1945 = vmatprep.subr.bf16.mxu0 %v1347
    %1946 = vmatpush1.bf16.msra.mxu0 %v1346
    %1947 = vmatprep.subr.bf16.mxu0 %v1351
    %1948 = vmatpush1.bf16.msra.mxu0 %v1350
    %1949 = vmatprep.subr.bf16.mxu0 %v1355
    %1950 = vmatpush1.bf16.msra.mxu0 %v1354
    %1951 = vmatprep.subr.bf16.mxu0 %v1359
    %1952 = vmatpush1.bf16.msra.mxu0 %v1358
    %1953 = vmatprep.subr.bf16.mxu0 %v1363
    %1954 = vmatpush1.bf16.msra.mxu0 %v1362
    %1955 = vmatprep.subr.bf16.mxu0 %v1367
    %1956 = vmatpush1.bf16.msra.mxu0 %v1366
    %1957 = vmatprep.subr.bf16.mxu0 %v1371
    %1958 = vmatpush1.bf16.msra.mxu0 %v1370
    %1959 = vmatprep.subr.bf16.mxu0 %v1375
    %1960 = vmatpush1.bf16.msra.mxu0 %v1374
    %1961 = vmatprep.subr.bf16.mxu0 %v1379
    %1962 = vmatpush1.bf16.msra.mxu0 %v1378
    %1963 = vmatprep.subr.bf16.mxu0 %v1383
    %1964 = vmatpush1.bf16.msra.mxu0 %v1382
    %1965 = vmatprep.subr.bf16.mxu0 %v1387
    %1966 = vmatpush1.bf16.msra.mxu0 %v1386
    %1967 = vmatprep.subr.bf16.mxu0 %v1391
    %1968 = vmatpush1.bf16.msra.mxu0 %v1390
    %1969 = vmatprep.subr.bf16.mxu0 %v1395
    %1970 = vmatpush1.bf16.msra.mxu0 %v1394
    %1971 = vmatprep.mubr.bf16.mxu0 %v93
    %1972 = vmatmul.mubr.bf16.gmra.mrb[0].mxu0 %v92
    %v1973 = vpop.f32.mrb[0].mxu0
    %v1974 = vadd.f32 %v1933, %v1973
    %v1975 = vpop.f32.mrb[0].mxu0
    %v1976 = vadd.f32 %v1935, %v1975
    %v1977 = vpop.f32.mrb[0].mxu0
    %v1978 = vpop.f32.mrb[0].mxu0
    %1979 = vdwg.mxu0
    %vm1980 = vcmp.ge.f32.partialorder %v1810, 0.0
    %vm1981 = vcmp.ge.f32.partialorder %v1812, 0.0
    %vm1982 = vcmp.ge.f32.partialorder %v1974, 0.0
    %vm1983 = vcmp.ge.f32.partialorder %v1976, 0.0
    %v1984 = vmul.f32 %v1810, 0.2
    %v1985 = vmul.f32 %v1812, 0.2
    %v1986 = vmul.f32 %v1974, 0.2
    %v1987 = vmul.f32 %v1976, 0.2
    %v1988 = vsel %vm1980, %v1810, %v1984
    %v1989 = vsel %vm1981, %v1812, %v1985
    %v1990 = vsel %vm1982, %v1974, %v1986
    %v1991 = vsel %vm1983, %v1976, %v1987
    %v1992 = vpack.c.bf16 %v1988, %v1988
    %v1993 = vpack.c.bf16 %v1989, %v1989
    %v1994 = vpack.c.bf16 %v1990, %v1990
    %v1995 = vpack.c.bf16 %v1991, %v1991
    %v1996 = vld [vmem:[%s3] sm:$0xff]
    %v1997 = vld [vmem:[%s3 + $0x8] sm:$0xff]
    %v1998 = vld [vmem:[%s3 + $0x10] sm:$0xff]
    %v1999 = vld [vmem:[%s3 + $0x18] sm:$0xff]
    %v2000 = vld [vmem:[%s3 + $0x20] sm:$0xff]
    %v2001 = vld [vmem:[%s3 + $0x28] sm:$0xff]
    %v2002 = vld [vmem:[%s3 + $0x30] sm:$0xff]
    %v2003 = vld [vmem:[%s3 + $0x38] sm:$0xff]
    %v2004 = vld [vmem:[%s3 + $0x40] sm:$0xff]
    %v2005 = vld [vmem:[%s3 + $0x48] sm:$0xff]
    %v2006 = vld [vmem:[%s3 + $0x50] sm:$0xff]
    %v2007 = vld [vmem:[%s3 + $0x58] sm:$0xff]
    %v2008 = vld [vmem:[%s3 + $0x60] sm:$0xff]
    %v2009 = vld [vmem:[%s3 + $0x68] sm:$0xff]
    %v2010 = vld [vmem:[%s3 + $0x70] sm:$0xff]
    %v2011 = vld [vmem:[%s3 + $0x78] sm:$0xff]
    %v2012 = vld [vmem:[%s3 + $0x80] sm:$0xff]
    %v2013 = vld [vmem:[%s3 + $0x88] sm:$0xff]
    %v2014 = vld [vmem:[%s3 + $0x90] sm:$0xff]
    %v2015 = vld [vmem:[%s3 + $0x98] sm:$0xff]
    %v2016 = vld [vmem:[%s3 + $0xa0] sm:$0xff]
    %v2017 = vld [vmem:[%s3 + $0xa8] sm:$0xff]
    %v2018 = vld [vmem:[%s3 + $0xb0] sm:$0xff]
    %v2019 = vld [vmem:[%s3 + $0xb8] sm:$0xff]
    %v2020 = vld [vmem:[%s3 + $0xc0] sm:$0xff]
    %v2021 = vld [vmem:[%s3 + $0xc8] sm:$0xff]
    %v2022 = vld [vmem:[%s3 + $0xd0] sm:$0xff]
    %v2023 = vld [vmem:[%s3 + $0xd8] sm:$0xff]
    %v2024 = vld [vmem:[%s3 + $0xe0] sm:$0xff]
    %v2025 = vld [vmem:[%s3 + $0xe8] sm:$0xff]
    %v2026 = vld [vmem:[%s3 + $0xf0] sm:$0xff]
    %v2027 = vld [vmem:[%s3 + $0xf8] sm:$0xff]
    %v2028 = vld [vmem:[%s3 + $0x100] sm:$0xff]
    %v2029 = vld [vmem:[%s3 + $0x108] sm:$0xff]
    %v2030 = vld [vmem:[%s3 + $0x110] sm:$0xff]
    %v2031 = vld [vmem:[%s3 + $0x118] sm:$0xff]
    %v2032 = vld [vmem:[%s3 + $0x120] sm:$0xff]
    %v2033 = vld [vmem:[%s3 + $0x128] sm:$0xff]
    %v2034 = vld [vmem:[%s3 + $0x130] sm:$0xff]
    %v2035 = vld [vmem:[%s3 + $0x138] sm:$0xff]
    %v2036 = vld [vmem:[%s3 + $0x140] sm:$0xff]
    %v2037 = vld [vmem:[%s3 + $0x148] sm:$0xff]
    %v2038 = vld [vmem:[%s3 + $0x150] sm:$0xff]
    %v2039 = vld [vmem:[%s3 + $0x158] sm:$0xff]
    %v2040 = vld [vmem:[%s3 + $0x160] sm:$0xff]
    %v2041 = vld [vmem:[%s3 + $0x168] sm:$0xff]
    %v2042 = vld [vmem:[%s3 + $0x170] sm:$0xff]
    %v2043 = vld [vmem:[%s3 + $0x178] sm:$0xff]
    %v2044 = vld [vmem:[%s3 + $0x180] sm:$0xff]
    %v2045 = vld [vmem:[%s3 + $0x188] sm:$0xff]
    %v2046 = vld [vmem:[%s3 + $0x190] sm:$0xff]
    %v2047 = vld [vmem:[%s3 + $0x198] sm:$0xff]
    %v2048 = vld [vmem:[%s3 + $0x1a0] sm:$0xff]
    %v2049 = vld [vmem:[%s3 + $0x1a8] sm:$0xff]
    %v2050 = vld [vmem:[%s3 + $0x1b0] sm:$0xff]
    %v2051 = vld [vmem:[%s3 + $0x1b8] sm:$0xff]
    %v2052 = vld [vmem:[%s3 + $0x1c0] sm:$0xff]
    %v2053 = vld [vmem:[%s3 + $0x1c8] sm:$0xff]
    %v2054 = vld [vmem:[%s3 + $0x1d0] sm:$0xff]
    %v2055 = vld [vmem:[%s3 + $0x1d8] sm:$0xff]
    %v2056 = vld [vmem:[%s3 + $0x1e0] sm:$0xff]
    %v2057 = vld [vmem:[%s3 + $0x1e8] sm:$0xff]
    %v2058 = vld [vmem:[%s3 + $0x1f0] sm:$0xff]
    %v2059 = vld [vmem:[%s3 + $0x1f8] sm:$0xff]
    %v2060 = vld [vmem:[%s4] sm:$0x3]
    %v2062 = vlaneseq
    %v2063 = vshrl.u32 %v2062, 7
    %v2064 = vsub.s32 0, %v2063
    %v2065 = vrot.slane %v2060, %v2064
    %v2066 = vlaneseq
    %v2067 = vshrl.u32 %v2066, 7
    %v2068 = vsub.s32 1, %v2067
    %v2069 = vrot.slane %v2060, %v2068
    %v2136 = vunpack.c.l.b16 %v1996
    %v2137 = vunpack.c.h.b16 %v1996
    %v2138 = vunpack.c.l.b16 %v1997
    %v2139 = vunpack.c.h.b16 %v1997
    %v2140 = vunpack.c.l.b16 %v1998
    %v2141 = vunpack.c.h.b16 %v1998
    %v2142 = vunpack.c.l.b16 %v1999
    %v2143 = vunpack.c.h.b16 %v1999
    %v2144 = vunpack.c.l.b16 %v2000
    %v2145 = vunpack.c.h.b16 %v2000
    %v2146 = vunpack.c.l.b16 %v2001
    %v2147 = vunpack.c.h.b16 %v2001
    %v2148 = vunpack.c.l.b16 %v2002
    %v2149 = vunpack.c.h.b16 %v2002
    %v2150 = vunpack.c.l.b16 %v2003
    %v2151 = vunpack.c.h.b16 %v2003
    %v2152 = vunpack.c.l.b16 %v2004
    %v2153 = vunpack.c.h.b16 %v2004
    %v2154 = vunpack.c.l.b16 %v2005
    %v2155 = vunpack.c.h.b16 %v2005
    %v2156 = vunpack.c.l.b16 %v2006
    %v2157 = vunpack.c.h.b16 %v2006
    %v2158 = vunpack.c.l.b16 %v2007
    %v2159 = vunpack.c.h.b16 %v2007
    %v2160 = vunpack.c.l.b16 %v2008
    %v2161 = vunpack.c.h.b16 %v2008
    %v2162 = vunpack.c.l.b16 %v2009
    %v2163 = vunpack.c.h.b16 %v2009
    %v2164 = vunpack.c.l.b16 %v2010
    %v2165 = vunpack.c.h.b16 %v2010
    %v2166 = vunpack.c.l.b16 %v2011
    %v2167 = vunpack.c.h.b16 %v2011
    %v2168 = vunpack.c.l.b16 %v2012
    %v2169 = vunpack.c.h.b16 %v2012
    %v2170 = vunpack.c.l.b16 %v2013
    %v2171 = vunpack.c.h.b16 %v2013
    %v2172 = vunpack.c.l.b16 %v2014
    %v2173 = vunpack.c.h.b16 %v2014
    %v2174 = vunpack.c.l.b16 %v2015
    %v2175 = vunpack.c.h.b16 %v2015
    %v2176 = vunpack.c.l.b16 %v2016
    %v2177 = vunpack.c.h.b16 %v2016
    %v2178 = vunpack.c.l.b16 %v2017
    %v2179 = vunpack.c.h.b16 %v2017
    %v2180 = vunpack.c.l.b16 %v2018
    %v2181 = vunpack.c.h.b16 %v2018
    %v2182 = vunpack.c.l.b16 %v2019
    %v2183 = vunpack.c.h.b16 %v2019
    %v2184 = vunpack.c.l.b16 %v2020
    %v2185 = vunpack.c.h.b16 %v2020
    %v2186 = vunpack.c.l.b16 %v2021
    %v2187 = vunpack.c.h.b16 %v2021
    %v2188 = vunpack.c.l.b16 %v2022
    %v2189 = vunpack.c.h.b16 %v2022
    %v2190 = vunpack.c.l.b16 %v2023
    %v2191 = vunpack.c.h.b16 %v2023
    %v2192 = vunpack.c.l.b16 %v2024
    %v2193 = vunpack.c.h.b16 %v2024
    %v2194 = vunpack.c.l.b16 %v2025
    %v2195 = vunpack.c.h.b16 %v2025
    %v2196 = vunpack.c.l.b16 %v2026
    %v2197 = vunpack.c.h.b16 %v2026
    %v2198 = vunpack.c.l.b16 %v2027
    %v2199 = vunpack.c.h.b16 %v2027
    %v2200 = vunpack.c.l.b16 %v2028
    %v2201 = vunpack.c.h.b16 %v2028
    %v2202 = vunpack.c.l.b16 %v2029
    %v2203 = vunpack.c.h.b16 %v2029
    %v2204 = vunpack.c.l.b16 %v2030
    %v2205 = vunpack.c.h.b16 %v2030
    %v2206 = vunpack.c.l.b16 %v2031
    %v2207 = vunpack.c.h.b16 %v2031
    %v2208 = vunpack.c.l.b16 %v2032
    %v2209 = vunpack.c.h.b16 %v2032
    %v2210 = vunpack.c.l.b16 %v2033
    %v2211 = vunpack.c.h.b16 %v2033
    %v2212 = vunpack.c.l.b16 %v2034
    %v2213 = vunpack.c.h.b16 %v2034
    %v2214 = vunpack.c.l.b16 %v2035
    %v2215 = vunpack.c.h.b16 %v2035
    %v2216 = vunpack.c.l.b16 %v2036
    %v2217 = vunpack.c.h.b16 %v2036
    %v2218 = vunpack.c.l.b16 %v2037
    %v2219 = vunpack.c.h.b16 %v2037
    %v2220 = vunpack.c.l.b16 %v2038
    %v2221 = vunpack.c.h.b16 %v2038
    %v2222 = vunpack.c.l.b16 %v2039
    %v2223 = vunpack.c.h.b16 %v2039
    %v2224 = vunpack.c.l.b16 %v2040
    %v2225 = vunpack.c.h.b16 %v2040
    %v2226 = vunpack.c.l.b16 %v2041
    %v2227 = vunpack.c.h.b16 %v2041
    %v2228 = vunpack.c.l.b16 %v2042
    %v2229 = vunpack.c.h.b16 %v2042
    %v2230 = vunpack.c.l.b16 %v2043
    %v2231 = vunpack.c.h.b16 %v2043
    %v2232 = vunpack.c.l.b16 %v2044
    %v2233 = vunpack.c.h.b16 %v2044
    %v2234 = vunpack.c.l.b16 %v2045
    %v2235 = vunpack.c.h.b16 %v2045
    %v2236 = vunpack.c.l.b16 %v2046
    %v2237 = vunpack.c.h.b16 %v2046
    %v2238 = vunpack.c.l.b16 %v2047
    %v2239 = vunpack.c.h.b16 %v2047
    %v2240 = vunpack.c.l.b16 %v2048
    %v2241 = vunpack.c.h.b16 %v2048
    %v2242 = vunpack.c.l.b16 %v2049
    %v2243 = vunpack.c.h.b16 %v2049
    %v2244 = vunpack.c.l.b16 %v2050
    %v2245 = vunpack.c.h.b16 %v2050
    %v2246 = vunpack.c.l.b16 %v2051
    %v2247 = vunpack.c.h.b16 %v2051
    %v2248 = vunpack.c.l.b16 %v2052
    %v2249 = vunpack.c.h.b16 %v2052
    %v2250 = vunpack.c.l.b16 %v2053
    %v2251 = vunpack.c.h.b16 %v2053
    %v2252 = vunpack.c.l.b16 %v2054
    %v2253 = vunpack.c.h.b16 %v2054
    %v2254 = vunpack.c.l.b16 %v2055
    %v2255 = vunpack.c.h.b16 %v2055
    %v2256 = vunpack.c.l.b16 %v2056
    %v2257 = vunpack.c.h.b16 %v2056
    %v2258 = vunpack.c.l.b16 %v2057
    %v2259 = vunpack.c.h.b16 %v2057
    %v2260 = vunpack.c.l.b16 %v2058
    %v2261 = vunpack.c.h.b16 %v2058
    %v2262 = vunpack.c.l.b16 %v2059
    %v2263 = vunpack.c.h.b16 %v2059
    %v2264 = vpack.c.b16 %v2138, %v2136
    %v2265 = vpack.c.b16 %v2139, %v2137
    %v2266 = vpack.c.b16 %v2142, %v2140
    %v2267 = vpack.c.b16 %v2143, %v2141
    %v2268 = vpack.c.b16 %v2146, %v2144
    %v2269 = vpack.c.b16 %v2147, %v2145
    %v2270 = vpack.c.b16 %v2150, %v2148
    %v2271 = vpack.c.b16 %v2151, %v2149
    %v2272 = vpack.c.b16 %v2154, %v2152
    %v2273 = vpack.c.b16 %v2155, %v2153
    %v2274 = vpack.c.b16 %v2158, %v2156
    %v2275 = vpack.c.b16 %v2159, %v2157
    %v2276 = vpack.c.b16 %v2162, %v2160
    %v2277 = vpack.c.b16 %v2163, %v2161
    %v2278 = vpack.c.b16 %v2166, %v2164
    %v2279 = vpack.c.b16 %v2167, %v2165
    %v2280 = vpack.c.b16 %v2170, %v2168
    %v2281 = vpack.c.b16 %v2171, %v2169
    %v2282 = vpack.c.b16 %v2174, %v2172
    %v2283 = vpack.c.b16 %v2175, %v2173
    %v2284 = vpack.c.b16 %v2178, %v2176
    %v2285 = vpack.c.b16 %v2179, %v2177
    %v2286 = vpack.c.b16 %v2182, %v2180
    %v2287 = vpack.c.b16 %v2183, %v2181
    %v2288 = vpack.c.b16 %v2186, %v2184
    %v2289 = vpack.c.b16 %v2187, %v2185
    %v2290 = vpack.c.b16 %v2190, %v2188
    %v2291 = vpack.c.b16 %v2191, %v2189
    %v2292 = vpack.c.b16 %v2194, %v2192
    %v2293 = vpack.c.b16 %v2195, %v2193
    %v2294 = vpack.c.b16 %v2198, %v2196
    %v2295 = vpack.c.b16 %v2199, %v2197
    %v2296 = vpack.c.b16 %v2202, %v2200
    %v2297 = vpack.c.b16 %v2203, %v2201
    %v2298 = vpack.c.b16 %v2206, %v2204
    %v2299 = vpack.c.b16 %v2207, %v2205
    %v2300 = vpack.c.b16 %v2210, %v2208
    %v2301 = vpack.c.b16 %v2211, %v2209
    %v2302 = vpack.c.b16 %v2214, %v2212
    %v2303 = vpack.c.b16 %v2215, %v2213
    %v2304 = vpack.c.b16 %v2218, %v2216
    %v2305 = vpack.c.b16 %v2219, %v2217
    %v2306 = vpack.c.b16 %v2222, %v2220
    %v2307 = vpack.c.b16 %v2223, %v2221
    %v2308 = vpack.c.b16 %v2226, %v2224
    %v2309 = vpack.c.b16 %v2227, %v2225
    %v2310 = vpack.c.b16 %v2230, %v2228
    %v2311 = vpack.c.b16 %v2231, %v2229
    %v2312 = vpack.c.b16 %v2234, %v2232
    %v2313 = vpack.c.b16 %v2235, %v2233
    %v2314 = vpack.c.b16 %v2238, %v2236
    %v2315 = vpack.c.b16 %v2239, %v2237
    %v2316 = vpack.c.b16 %v2242, %v2240
    %v2317 = vpack.c.b16 %v2243, %v2241
    %v2318 = vpack.c.b16 %v2246, %v2244
    %v2319 = vpack.c.b16 %v2247, %v2245
    %v2320 = vpack.c.b16 %v2250, %v2248
    %v2321 = vpack.c.b16 %v2251, %v2249
    %v2322 = vpack.c.b16 %v2254, %v2252
    %v2323 = vpack.c.b16 %v2255, %v2253
    %v2324 = vpack.c.b16 %v2258, %v2256
    %v2325 = vpack.c.b16 %v2259, %v2257
    %v2326 = vpack.c.b16 %v2262, %v2260
    %v2327 = vpack.c.b16 %v2263, %v2261
    %2392 = vmatprep.subr.bf16.mxu0 %v2265
    %2393 = vmatpush1.bf16.msra.mxu0 %v2264
    %2394 = vmatprep.subr.bf16.mxu0 %v2267
    %2395 = vmatpush1.bf16.msra.mxu0 %v2266
    %2396 = vmatprep.subr.bf16.mxu0 %v2269
    %2397 = vmatpush1.bf16.msra.mxu0 %v2268
    %2398 = vmatprep.subr.bf16.mxu0 %v2271
    %2399 = vmatpush1.bf16.msra.mxu0 %v2270
    %2400 = vmatprep.subr.bf16.mxu0 %v2273
    %2401 = vmatpush1.bf16.msra.mxu0 %v2272
    %2402 = vmatprep.subr.bf16.mxu0 %v2275
    %2403 = vmatpush1.bf16.msra.mxu0 %v2274
    %2404 = vmatprep.subr.bf16.mxu0 %v2277
    %2405 = vmatpush1.bf16.msra.mxu0 %v2276
    %2406 = vmatprep.subr.bf16.mxu0 %v2279
    %2407 = vmatpush1.bf16.msra.mxu0 %v2278
    %2408 = vmatprep.subr.bf16.mxu0 %v2281
    %2409 = vmatpush1.bf16.msra.mxu0 %v2280
    %2410 = vmatprep.subr.bf16.mxu0 %v2283
    %2411 = vmatpush1.bf16.msra.mxu0 %v2282
    %2412 = vmatprep.subr.bf16.mxu0 %v2285
    %2413 = vmatpush1.bf16.msra.mxu0 %v2284
    %2414 = vmatprep.subr.bf16.mxu0 %v2287
    %2415 = vmatpush1.bf16.msra.mxu0 %v2286
    %2416 = vmatprep.subr.bf16.mxu0 %v2289
    %2417 = vmatpush1.bf16.msra.mxu0 %v2288
    %2418 = vmatprep.subr.bf16.mxu0 %v2291
    %2419 = vmatpush1.bf16.msra.mxu0 %v2290
    %2420 = vmatprep.subr.bf16.mxu0 %v2293
    %2421 = vmatpush1.bf16.msra.mxu0 %v2292
    %2422 = vmatprep.subr.bf16.mxu0 %v2295
    %2423 = vmatpush1.bf16.msra.mxu0 %v2294
    %2424 = vmatprep.mubr.bf16.mxu0 %v1993
    %2425 = vmatmul.mubr.bf16.gmra.mrb[0].mxu0 %v1992
    %v2426 = vpop.f32.mrb[0].mxu0
    %v2427 = vadd.f32 %v2065, %v2426
    %v2428 = vpop.f32.mrb[0].mxu0
    %v2429 = vadd.f32 %v2069, %v2428
    %v2430 = vpop.f32.mrb[0].mxu0
    %v2431 = vpop.f32.mrb[0].mxu0
    %2432 = vdwg.mxu0
    %2433 = vmatprep.subr.bf16.mxu0 %v2297
    %2434 = vmatpush1.bf16.msra.mxu0 %v2296
    %2435 = vmatprep.subr.bf16.mxu0 %v2299
    %2436 = vmatpush1.bf16.msra.mxu0 %v2298
    %2437 = vmatprep.subr.bf16.mxu0 %v2301
    %2438 = vmatpush1.bf16.msra.mxu0 %v2300
    %2439 = vmatprep.subr.bf16.mxu0 %v2303
    %2440 = vmatpush1.bf16.msra.mxu0 %v2302
    %2441 = vmatprep.subr.bf16.mxu0 %v2305
    %2442 = vmatpush1.bf16.msra.mxu0 %v2304
    %2443 = vmatprep.subr.bf16.mxu0 %v2307
    %2444 = vmatpush1.bf16.msra.mxu0 %v2306
    %2445 = vmatprep.subr.bf16.mxu0 %v2309
    %2446 = vmatpush1.bf16.msra.mxu0 %v2308
    %2447 = vmatprep.subr.bf16.mxu0 %v2311
    %2448 = vmatpush1.bf16.msra.mxu0 %v2310
    %2449 = vmatprep.subr.bf16.mxu0 %v2313
    %2450 = vmatpush1.bf16.msra.mxu0 %v2312
    %2451 = vmatprep.subr.bf16.mxu0 %v2315
    %2452 = vmatpush1.bf16.msra.mxu0 %v2314
    %2453 = vmatprep.subr.bf16.mxu0 %v2317
    %2454 = vmatpush1.bf16.msra.mxu0 %v2316
    %2455 = vmatprep.subr.bf16.mxu0 %v2319
    %2456 = vmatpush1.bf16.msra.mxu0 %v2318
    %2457 = vmatprep.subr.bf16.mxu0 %v2321
    %2458 = vmatpush1.bf16.msra.mxu0 %v2320
    %2459 = vmatprep.subr.bf16.mxu0 %v2323
    %2460 = vmatpush1.bf16.msra.mxu0 %v2322
    %2461 = vmatprep.subr.bf16.mxu0 %v2325
    %2462 = vmatpush1.bf16.msra.mxu0 %v2324
    %2463 = vmatprep.subr.bf16.mxu0 %v2327
    %2464 = vmatpush1.bf16.msra.mxu0 %v2326
    %2465 = vmatprep.mubr.bf16.mxu0 %v1995
    %2466 = vmatmul.mubr.bf16.gmra.mrb[0].mxu0 %v1994
    %v2467 = vpop.f32.mrb[0].mxu0
    %v2468 = vadd.f32 %v2427, %v2467
    %v2469 = vpop.f32.mrb[0].mxu0
    %v2470 = vadd.f32 %v2429, %v2469
    %v2471 = vpop.f32.mrb[0].mxu0
    %v2472 = vpop.f32.mrb[0].mxu0
    %2473 = vdwg.mxu0
    %vm2474 = vcmask 1041408
    %v2475 = vsel %vm2474, %v2468, 0.0
    %v2476 = vrot.slane %v2475, 4
    %v2477 = vadd.f32 %v2475, %v2476
    %v2478 = vrot.slane %v2477, 2
    %v2479 = vadd.f32 %v2477, %v2478
    %v2480 = vrot.slane %v2479, 1
    %v2481 = vadd.f32 %v2479, %v2480
    %v2482 = vsel %vm2474, %v2470, 0.0
    %v2483 = vrot.slane %v2482, 4
    %v2484 = vadd.f32 %v2482, %v2483
    %v2485 = vrot.slane %v2484, 2
    %v2486 = vadd.f32 %v2484, %v2485
    %v2487 = vrot.slane %v2486, 1
    %v2488 = vadd.f32 %v2486, %v2487
    %v2489 = vld [vmem:[%s5] sm:$0xff]
    %v2490 = vld [vmem:[%s5 + $0x8] sm:$0xff]
    %v2491 = vld [vmem:[%s5 + $0x10] sm:$0xff]
    %v2492 = vld [vmem:[%s5 + $0x18] sm:$0xff]
    %v2493 = vld [vmem:[%s5 + $0x20] sm:$0xff]
    %v2494 = vld [vmem:[%s5 + $0x28] sm:$0xff]
    %v2495 = vld [vmem:[%s5 + $0x30] sm:$0xff]
    %v2496 = vld [vmem:[%s5 + $0x38] sm:$0xff]
    %v2497 = vld [vmem:[%s5 + $0x40] sm:$0xff]
    %v2498 = vld [vmem:[%s5 + $0x48] sm:$0xff]
    %v2499 = vld [vmem:[%s5 + $0x50] sm:$0xff]
    %v2500 = vld [vmem:[%s5 + $0x58] sm:$0xff]
    %v2501 = vld [vmem:[%s5 + $0x60] sm:$0xff]
    %v2502 = vld [vmem:[%s5 + $0x68] sm:$0xff]
    %v2503 = vld [vmem:[%s5 + $0x70] sm:$0xff]
    %v2504 = vld [vmem:[%s5 + $0x78] sm:$0xff]
    %v2505 = vld [vmem:[%s5 + $0x80] sm:$0xff]
    %v2506 = vld [vmem:[%s5 + $0x88] sm:$0xff]
    %v2507 = vld [vmem:[%s5 + $0x90] sm:$0xff]
    %v2508 = vld [vmem:[%s5 + $0x98] sm:$0xff]
    %v2509 = vld [vmem:[%s5 + $0xa0] sm:$0xff]
    %v2510 = vld [vmem:[%s5 + $0xa8] sm:$0xff]
    %v2511 = vld [vmem:[%s5 + $0xb0] sm:$0xff]
    %v2512 = vld [vmem:[%s5 + $0xb8] sm:$0xff]
    %v2513 = vld [vmem:[%s5 + $0xc0] sm:$0xff]
    %v2514 = vld [vmem:[%s5 + $0xc8] sm:$0xff]
    %v2515 = vld [vmem:[%s5 + $0xd0] sm:$0xff]
    %v2516 = vld [vmem:[%s5 + $0xd8] sm:$0xff]
    %v2517 = vld [vmem:[%s5 + $0xe0] sm:$0xff]
    %v2518 = vld [vmem:[%s5 + $0xe8] sm:$0xff]
    %v2519 = vld [vmem:[%s5 + $0xf0] sm:$0xff]
    %v2520 = vld [vmem:[%s5 + $0xf8] sm:$0xff]
    %2521 = vmatprep.subr.mxu0 0.0
    %2522 = vmatpush1.msra.mxu0 %v2489
    %2523 = vmatprep.subr.mxu0 0.0
    %2524 = vmatpush1.msra.mxu0 %v2490
    %2525 = vmatprep.subr.mxu0 0.0
    %2526 = vmatpush1.msra.mxu0 %v2491
    %2527 = vmatprep.subr.mxu0 0.0
    %2528 = vmatpush1.msra.mxu0 %v2492
    %2529 = vmatprep.subr.mxu0 0.0
    %2530 = vmatpush1.msra.mxu0 %v2493
    %2531 = vmatprep.subr.mxu0 0.0
    %2532 = vmatpush1.msra.mxu0 %v2494
    %2533 = vmatprep.subr.mxu0 0.0
    %2534 = vmatpush1.msra.mxu0 %v2495
    %2535 = vmatprep.subr.mxu0 0.0
    %2536 = vmatpush1.msra.mxu0 %v2496
    %2537 = vmatprep.subr.mxu0 0.0
    %2538 = vmatpush1.msra.mxu0 %v2497
    %2539 = vmatprep.subr.mxu0 0.0
    %2540 = vmatpush1.msra.mxu0 %v2498
    %2541 = vmatprep.subr.mxu0 0.0
    %2542 = vmatpush1.msra.mxu0 %v2499
    %2543 = vmatprep.subr.mxu0 0.0
    %2544 = vmatpush1.msra.mxu0 %v2500
    %2545 = vmatprep.subr.mxu0 0.0
    %2546 = vmatpush1.msra.mxu0 %v2501
    %2547 = vmatprep.subr.mxu0 0.0
    %2548 = vmatpush1.msra.mxu0 %v2502
    %2549 = vmatprep.subr.mxu0 0.0
    %2550 = vmatpush1.msra.mxu0 %v2503
    %2551 = vmatprep.subr.mxu0 0.0
    %2552 = vmatpush1.msra.mxu0 %v2504
    %2553 = vmatprep.subr.mxu0 0.0
    %2554 = vmatpush1.msra.mxu0 %v2505
    %2555 = vmatprep.subr.mxu0 0.0
    %2556 = vmatpush1.msra.mxu0 %v2506
    %2557 = vmatprep.subr.mxu0 0.0
    %2558 = vmatpush1.msra.mxu0 %v2507
    %2559 = vmatprep.subr.mxu0 0.0
    %2560 = vmatpush1.msra.mxu0 %v2508
    %2561 = vmatprep.subr.mxu0 0.0
    %2562 = vmatpush1.msra.mxu0 %v2509
    %2563 = vmatprep.subr.mxu0 0.0
    %2564 = vmatpush1.msra.mxu0 %v2510
    %2565 = vmatprep.subr.mxu0 0.0
    %2566 = vmatpush1.msra.mxu0 %v2511
    %2567 = vmatprep.subr.mxu0 0.0
    %2568 = vmatpush1.msra.mxu0 %v2512
    %2569 = vmatprep.subr.mxu0 0.0
    %2570 = vmatpush1.msra.mxu0 %v2513
    %2571 = vmatprep.subr.mxu0 0.0
    %2572 = vmatpush1.msra.mxu0 %v2514
    %2573 = vmatprep.subr.mxu0 0.0
    %2574 = vmatpush1.msra.mxu0 %v2515
    %2575 = vmatprep.subr.mxu0 0.0
    %2576 = vmatpush1.msra.mxu0 %v2516
    %2577 = vmatprep.subr.mxu0 0.0
    %2578 = vmatpush1.msra.mxu0 %v2517
    %2579 = vmatprep.subr.mxu0 0.0
    %2580 = vmatpush1.msra.mxu0 %v2518
    %2581 = vmatprep.subr.mxu0 0.0
    %2582 = vmatpush1.msra.mxu0 %v2519
    %2583 = vmatprep.subr.mxu0 0.0
    %2584 = vmatpush1.msra.mxu0 %v2520
    %2585 = vmatprep.mubr.f32.mxu0 %v2488
    %2586 = vmatmul.mubr.f32.gmra.mrb[0].mxu0 %v2481
    %v2587 = vpop.f32.mrb[0].mxu0
    %v2588 = vadd.f32 0.0, %v2587
    %v2589 = vpop.f32.mrb[0].mxu0
    %2590 = vdwg.mxu0
    %v2591 = vmul.f32 %v2588, 0.03125
    %v2592 = vld [vmem:[%s6] sm:$0xff]
    %v2593 = vld [vmem:[%s6 + $0x8] sm:$0xff]
    %v2594 = vld [vmem:[%s6 + $0x10] sm:$0xff]
    %v2595 = vld [vmem:[%s6 + $0x18] sm:$0xff]
    %vm2596 = vcmask 130048
    %v2598 = vsel %vm2596, %v2591, 0
    %2600 = vmatprep.subr.mxu0 %v2593
    %2601 = vmatpush1.msra.mxu0 %v2592
    %2602 = vmatprep.subr.mxu0 %v2595
    %2603 = vmatpush1.msra.mxu0 %v2594
    %2604 = vmatprep.subr.mxu0 0.0
    %2605 = vmatpush1.msra.mxu0 0.0
    %2606 = vmatprep.subr.mxu0 0.0
    %2607 = vmatpush1.msra.mxu0 0.0
    %2608 = vmatprep.subr.mxu0 0.0
    %2609 = vmatpush1.msra.mxu0 0.0
    %2610 = vmatprep.subr.mxu0 0.0
    %2611 = vmatpush1.msra.mxu0 0.0
    %2612 = vmatprep.subr.mxu0 0.0
    %2613 = vmatpush1.msra.mxu0 0.0
    %2614 = vmatprep.subr.mxu0 0.0
    %2615 = vmatpush1.msra.mxu0 0.0
    %2616 = vmatprep.subr.mxu0 0.0
    %2617 = vmatpush1.msra.mxu0 0.0
    %2618 = vmatprep.subr.mxu0 0.0
    %2619 = vmatpush1.msra.mxu0 0.0
    %2620 = vmatprep.subr.mxu0 0.0
    %2621 = vmatpush1.msra.mxu0 0.0
    %2622 = vmatprep.subr.mxu0 0.0
    %2623 = vmatpush1.msra.mxu0 0.0
    %2624 = vmatprep.subr.mxu0 0.0
    %2625 = vmatpush1.msra.mxu0 0.0
    %2626 = vmatprep.subr.mxu0 0.0
    %2627 = vmatpush1.msra.mxu0 0.0
    %2628 = vmatprep.subr.mxu0 0.0
    %2629 = vmatpush1.msra.mxu0 0.0
    %2630 = vmatprep.subr.mxu0 0.0
    %2631 = vmatpush1.msra.mxu0 0.0
    %2632 = vmatprep.subr.mxu0 0.0
    %2633 = vmatpush1.msra.mxu0 0.0
    %2634 = vmatprep.subr.mxu0 0.0
    %2635 = vmatpush1.msra.mxu0 0.0
    %2636 = vmatprep.subr.mxu0 0.0
    %2637 = vmatpush1.msra.mxu0 0.0
    %2638 = vmatprep.subr.mxu0 0.0
    %2639 = vmatpush1.msra.mxu0 0.0
    %2640 = vmatprep.subr.mxu0 0.0
    %2641 = vmatpush1.msra.mxu0 0.0
    %2642 = vmatprep.subr.mxu0 0.0
    %2643 = vmatpush1.msra.mxu0 0.0
    %2644 = vmatprep.subr.mxu0 0.0
    %2645 = vmatpush1.msra.mxu0 0.0
    %2646 = vmatprep.subr.mxu0 0.0
    %2647 = vmatpush1.msra.mxu0 0.0
    %2648 = vmatprep.subr.mxu0 0.0
    %2649 = vmatpush1.msra.mxu0 0.0
    %2650 = vmatprep.subr.mxu0 0.0
    %2651 = vmatpush1.msra.mxu0 0.0
    %2652 = vmatprep.subr.mxu0 0.0
    %2653 = vmatpush1.msra.mxu0 0.0
    %2654 = vmatprep.subr.mxu0 0.0
    %2655 = vmatpush1.msra.mxu0 0.0
    %2656 = vmatprep.subr.mxu0 0.0
    %2657 = vmatpush1.msra.mxu0 0.0
    %2658 = vmatprep.subr.mxu0 0.0
    %2659 = vmatpush1.msra.mxu0 0.0
    %2660 = vmatprep.subr.mxu0 0.0
    %2661 = vmatpush1.msra.mxu0 0.0
    %2662 = vmatprep.subr.mxu0 0.0
    %2663 = vmatpush1.msra.mxu0 0.0
    %2664 = vmatprep.mubr.f32.mxu0 0.0
    %2665 = vmatmul.mubr.f32.gmra.mrb[0].mxu0 %v2598
    %v2666 = vpop.f32.mrb[0].mxu0
    %v2667 = vadd.f32 0.0, %v2666
    %v2668 = vpop.f32.mrb[0].mxu0
    %v2669 = vadd.f32 0.0, %v2668
    %2670 = vdwg.mxu0
    %v2671 = vlaneseq
    %v2672 = vshrl.u32 %v2671, 7
    %v2673 = vsub.s32 0, %v2672
    %v2674 = vrot.slane %v2667, %v2673
    %v2675 = vlaneseq
    %v2676 = vshrl.u32 %v2675, 7
    %v2677 = vsub.s32 0, %v2676
    %v2678 = vrot.slane %v2669, %v2677
    %v2679 = vsub.f32 %v2468, %v2674
    %v2680 = vsub.f32 %v2470, %v2678
    %v2681 = vmul.f32 %v2679, %v2679
    %v2682 = vmul.f32 %v2680, %v2680
    %v2683 = vsel %vm2474, %v2681, 0.0
    %v2684 = vrot.slane %v2683, 4
    %v2685 = vadd.f32 %v2683, %v2684
    %v2686 = vrot.slane %v2685, 2
    %v2687 = vadd.f32 %v2685, %v2686
    %v2688 = vrot.slane %v2687, 1
    %v2689 = vadd.f32 %v2687, %v2688
    %v2690 = vsel %vm2474, %v2682, 0.0
    %v2691 = vrot.slane %v2690, 4
    %v2692 = vadd.f32 %v2690, %v2691
    %v2693 = vrot.slane %v2692, 2
    %v2694 = vadd.f32 %v2692, %v2693
    %v2695 = vrot.slane %v2694, 1
    %v2696 = vadd.f32 %v2694, %v2695
    %2697 = vmatprep.subr.mxu0 0.0
    %2698 = vmatpush1.msra.mxu0 %v2489
    %2699 = vmatprep.subr.mxu0 0.0
    %2700 = vmatpush1.msra.mxu0 %v2490
    %2701 = vmatprep.subr.mxu0 0.0
    %2702 = vmatpush1.msra.mxu0 %v2491
    %2703 = vmatprep.subr.mxu0 0.0
    %2704 = vmatpush1.msra.mxu0 %v2492
    %2705 = vmatprep.subr.mxu0 0.0
    %2706 = vmatpush1.msra.mxu0 %v2493
    %2707 = vmatprep.subr.mxu0 0.0
    %2708 = vmatpush1.msra.mxu0 %v2494
    %2709 = vmatprep.subr.mxu0 0.0
    %2710 = vmatpush1.msra.mxu0 %v2495
    %2711 = vmatprep.subr.mxu0 0.0
    %2712 = vmatpush1.msra.mxu0 %v2496
    %2713 = vmatprep.subr.mxu0 0.0
    %2714 = vmatpush1.msra.mxu0 %v2497
    %2715 = vmatprep.subr.mxu0 0.0
    %2716 = vmatpush1.msra.mxu0 %v2498
    %2717 = vmatprep.subr.mxu0 0.0
    %2718 = vmatpush1.msra.mxu0 %v2499
    %2719 = vmatprep.subr.mxu0 0.0
    %2720 = vmatpush1.msra.mxu0 %v2500
    %2721 = vmatprep.subr.mxu0 0.0
    %2722 = vmatpush1.msra.mxu0 %v2501
    %2723 = vmatprep.subr.mxu0 0.0
    %2724 = vmatpush1.msra.mxu0 %v2502
    %2725 = vmatprep.subr.mxu0 0.0
    %2726 = vmatpush1.msra.mxu0 %v2503
    %2727 = vmatprep.subr.mxu0 0.0
    %2728 = vmatpush1.msra.mxu0 %v2504
    %2729 = vmatprep.subr.mxu0 0.0
    %2730 = vmatpush1.msra.mxu0 %v2505
    %2731 = vmatprep.subr.mxu0 0.0
    %2732 = vmatpush1.msra.mxu0 %v2506
    %2733 = vmatprep.subr.mxu0 0.0
    %2734 = vmatpush1.msra.mxu0 %v2507
    %2735 = vmatprep.subr.mxu0 0.0
    %2736 = vmatpush1.msra.mxu0 %v2508
    %2737 = vmatprep.subr.mxu0 0.0
    %2738 = vmatpush1.msra.mxu0 %v2509
    %2739 = vmatprep.subr.mxu0 0.0
    %2740 = vmatpush1.msra.mxu0 %v2510
    %2741 = vmatprep.subr.mxu0 0.0
    %2742 = vmatpush1.msra.mxu0 %v2511
    %2743 = vmatprep.subr.mxu0 0.0
    %2744 = vmatpush1.msra.mxu0 %v2512
    %2745 = vmatprep.subr.mxu0 0.0
    %2746 = vmatpush1.msra.mxu0 %v2513
    %2747 = vmatprep.subr.mxu0 0.0
    %2748 = vmatpush1.msra.mxu0 %v2514
    %2749 = vmatprep.subr.mxu0 0.0
    %2750 = vmatpush1.msra.mxu0 %v2515
    %2751 = vmatprep.subr.mxu0 0.0
    %2752 = vmatpush1.msra.mxu0 %v2516
    %2753 = vmatprep.subr.mxu0 0.0
    %2754 = vmatpush1.msra.mxu0 %v2517
    %2755 = vmatprep.subr.mxu0 0.0
    %2756 = vmatpush1.msra.mxu0 %v2518
    %2757 = vmatprep.subr.mxu0 0.0
    %2758 = vmatpush1.msra.mxu0 %v2519
    %2759 = vmatprep.subr.mxu0 0.0
    %2760 = vmatpush1.msra.mxu0 %v2520
    %2761 = vmatprep.mubr.f32.mxu0 %v2696
    %2762 = vmatmul.mubr.f32.gmra.mrb[0].mxu0 %v2689
    %v2763 = vpop.f32.mrb[0].mxu0
    %v2764 = vadd.f32 0.0, %v2763
    %v2765 = vpop.f32.mrb[0].mxu0
    %2766 = vdwg.mxu0
    %v2767 = vmul.f32 %v2764, 0.03125
    %v2768 = vld [vmem:[%s7] sm:$0x1]
    %v2769 = vadd.f32 %v2767, 1e-05
    %v2770 = vrsqrt.pop %v2769
    %v2771 = vmul.f32 %v2768, %v2770
    %v2772 = vld [vmem:[%s8] sm:$0x1]
    %v2773 = vmul.f32 %v2591, %v2771
    %v2774 = vsub.f32 %v2772, %v2773
    %v2776 = vsel %vm2596, %v2771, 0
    %2778 = vmatprep.subr.mxu0 %v2593
    %2779 = vmatpush1.msra.mxu0 %v2592
    %2780 = vmatprep.subr.mxu0 %v2595
    %2781 = vmatpush1.msra.mxu0 %v2594
    %2782 = vmatprep.subr.mxu0 0.0
    %2783 = vmatpush1.msra.mxu0 0.0
    %2784 = vmatprep.subr.mxu0 0.0
    %2785 = vmatpush1.msra.mxu0 0.0
    %2786 = vmatprep.subr.mxu0 0.0
    %2787 = vmatpush1.msra.mxu0 0.0
    %2788 = vmatprep.subr.mxu0 0.0
    %2789 = vmatpush1.msra.mxu0 0.0
    %2790 = vmatprep.subr.mxu0 0.0
    %2791 = vmatpush1.msra.mxu0 0.0
    %2792 = vmatprep.subr.mxu0 0.0
    %2793 = vmatpush1.msra.mxu0 0.0
    %2794 = vmatprep.subr.mxu0 0.0
    %2795 = vmatpush1.msra.mxu0 0.0
    %2796 = vmatprep.subr.mxu0 0.0
    %2797 = vmatpush1.msra.mxu0 0.0
    %2798 = vmatprep.subr.mxu0 0.0
    %2799 = vmatpush1.msra.mxu0 0.0
    %2800 = vmatprep.subr.mxu0 0.0
    %2801 = vmatpush1.msra.mxu0 0.0
    %2802 = vmatprep.subr.mxu0 0.0
    %2803 = vmatpush1.msra.mxu0 0.0
    %2804 = vmatprep.subr.mxu0 0.0
    %2805 = vmatpush1.msra.mxu0 0.0
    %2806 = vmatprep.subr.mxu0 0.0
    %2807 = vmatpush1.msra.mxu0 0.0
    %2808 = vmatprep.subr.mxu0 0.0
    %2809 = vmatpush1.msra.mxu0 0.0
    %2810 = vmatprep.subr.mxu0 0.0
    %2811 = vmatpush1.msra.mxu0 0.0
    %2812 = vmatprep.subr.mxu0 0.0
    %2813 = vmatpush1.msra.mxu0 0.0
    %2814 = vmatprep.subr.mxu0 0.0
    %2815 = vmatpush1.msra.mxu0 0.0
    %2816 = vmatprep.subr.mxu0 0.0
    %2817 = vmatpush1.msra.mxu0 0.0
    %2818 = vmatprep.subr.mxu0 0.0
    %2819 = vmatpush1.msra.mxu0 0.0
    %2820 = vmatprep.subr.mxu0 0.0
    %2821 = vmatpush1.msra.mxu0 0.0
    %2822 = vmatprep.subr.mxu0 0.0
    %2823 = vmatpush1.msra.mxu0 0.0
    %2824 = vmatprep.subr.mxu0 0.0
    %2825 = vmatpush1.msra.mxu0 0.0
    %2826 = vmatprep.subr.mxu0 0.0
    %2827 = vmatpush1.msra.mxu0 0.0
    %2828 = vmatprep.subr.mxu0 0.0
    %2829 = vmatpush1.msra.mxu0 0.0
    %2830 = vmatprep.subr.mxu0 0.0
    %2831 = vmatpush1.msra.mxu0 0.0
    %2832 = vmatprep.subr.mxu0 0.0
    %2833 = vmatpush1.msra.mxu0 0.0
    %2834 = vmatprep.subr.mxu0 0.0
    %2835 = vmatpush1.msra.mxu0 0.0
    %2836 = vmatprep.subr.mxu0 0.0
    %2837 = vmatpush1.msra.mxu0 0.0
    %2838 = vmatprep.subr.mxu0 0.0
    %2839 = vmatpush1.msra.mxu0 0.0
    %2840 = vmatprep.subr.mxu0 0.0
    %2841 = vmatpush1.msra.mxu0 0.0
    %2842 = vmatprep.mubr.f32.mxu0 0.0
    %2843 = vmatmul.mubr.f32.gmra.mrb[0].mxu0 %v2776
    %v2844 = vpop.f32.mrb[0].mxu0
    %v2845 = vadd.f32 0.0, %v2844
    %v2846 = vpop.f32.mrb[0].mxu0
    %v2847 = vadd.f32 0.0, %v2846
    %2848 = vdwg.mxu0
    %v2849 = vlaneseq
    %v2850 = vshrl.u32 %v2849, 7
    %v2851 = vsub.s32 0, %v2850
    %v2852 = vrot.slane %v2845, %v2851
    %v2853 = vlaneseq
    %v2854 = vshrl.u32 %v2853, 7
    %v2855 = vsub.s32 0, %v2854
    %v2856 = vrot.slane %v2847, %v2855
    %v2857 = vmul.f32 %v2468, %v2852
    %v2858 = vmul.f32 %v2470, %v2856
    %v2860 = vsel %vm2596, %v2774, 0
    %2862 = vmatprep.subr.mxu0 %v2593
    %2863 = vmatpush1.msra.mxu0 %v2592
    %2864 = vmatprep.subr.mxu0 %v2595
    %2865 = vmatpush1.msra.mxu0 %v2594
    %2866 = vmatprep.subr.mxu0 0.0
    %2867 = vmatpush1.msra.mxu0 0.0
    %2868 = vmatprep.subr.mxu0 0.0
    %2869 = vmatpush1.msra.mxu0 0.0
    %2870 = vmatprep.subr.mxu0 0.0
    %2871 = vmatpush1.msra.mxu0 0.0
    %2872 = vmatprep.subr.mxu0 0.0
    %2873 = vmatpush1.msra.mxu0 0.0
    %2874 = vmatprep.subr.mxu0 0.0
    %2875 = vmatpush1.msra.mxu0 0.0
    %2876 = vmatprep.subr.mxu0 0.0
    %2877 = vmatpush1.msra.mxu0 0.0
    %2878 = vmatprep.subr.mxu0 0.0
    %2879 = vmatpush1.msra.mxu0 0.0
    %2880 = vmatprep.subr.mxu0 0.0
    %2881 = vmatpush1.msra.mxu0 0.0
    %2882 = vmatprep.subr.mxu0 0.0
    %2883 = vmatpush1.msra.mxu0 0.0
    %2884 = vmatprep.subr.mxu0 0.0
    %2885 = vmatpush1.msra.mxu0 0.0
    %2886 = vmatprep.subr.mxu0 0.0
    %2887 = vmatpush1.msra.mxu0 0.0
    %2888 = vmatprep.subr.mxu0 0.0
    %2889 = vmatpush1.msra.mxu0 0.0
    %2890 = vmatprep.subr.mxu0 0.0
    %2891 = vmatpush1.msra.mxu0 0.0
    %2892 = vmatprep.subr.mxu0 0.0
    %2893 = vmatpush1.msra.mxu0 0.0
    %2894 = vmatprep.subr.mxu0 0.0
    %2895 = vmatpush1.msra.mxu0 0.0
    %2896 = vmatprep.subr.mxu0 0.0
    %2897 = vmatpush1.msra.mxu0 0.0
    %2898 = vmatprep.subr.mxu0 0.0
    %2899 = vmatpush1.msra.mxu0 0.0
    %2900 = vmatprep.subr.mxu0 0.0
    %2901 = vmatpush1.msra.mxu0 0.0
    %2902 = vmatprep.subr.mxu0 0.0
    %2903 = vmatpush1.msra.mxu0 0.0
    %2904 = vmatprep.subr.mxu0 0.0
    %2905 = vmatpush1.msra.mxu0 0.0
    %2906 = vmatprep.subr.mxu0 0.0
    %2907 = vmatpush1.msra.mxu0 0.0
    %2908 = vmatprep.subr.mxu0 0.0
    %2909 = vmatpush1.msra.mxu0 0.0
    %2910 = vmatprep.subr.mxu0 0.0
    %2911 = vmatpush1.msra.mxu0 0.0
    %2912 = vmatprep.subr.mxu0 0.0
    %2913 = vmatpush1.msra.mxu0 0.0
    %2914 = vmatprep.subr.mxu0 0.0
    %2915 = vmatpush1.msra.mxu0 0.0
    %2916 = vmatprep.subr.mxu0 0.0
    %2917 = vmatpush1.msra.mxu0 0.0
    %2918 = vmatprep.subr.mxu0 0.0
    %2919 = vmatpush1.msra.mxu0 0.0
    %2920 = vmatprep.subr.mxu0 0.0
    %2921 = vmatpush1.msra.mxu0 0.0
    %2922 = vmatprep.subr.mxu0 0.0
    %2923 = vmatpush1.msra.mxu0 0.0
    %2924 = vmatprep.subr.mxu0 0.0
    %2925 = vmatpush1.msra.mxu0 0.0
    %2926 = vmatprep.mubr.f32.mxu0 0.0
    %2927 = vmatmul.mubr.f32.gmra.mrb[0].mxu0 %v2860
    %v2928 = vpop.f32.mrb[0].mxu0
    %v2929 = vadd.f32 0.0, %v2928
    %v2930 = vpop.f32.mrb[0].mxu0
    %v2931 = vadd.f32 0.0, %v2930
    %2932 = vdwg.mxu0
    %v2933 = vlaneseq
    %v2934 = vshrl.u32 %v2933, 7
    %v2935 = vsub.s32 0, %v2934
    %v2936 = vrot.slane %v2929, %v2935
    %v2937 = vlaneseq
    %v2938 = vshrl.u32 %v2937, 7
    %v2939 = vsub.s32 0, %v2938
    %v2940 = vrot.slane %v2931, %v2939
    %v2941 = vadd.f32 %v2857, %v2936
    %v2942 = vadd.f32 %v2858, %v2940
    %vm2943 = vcmp.ge.f32.partialorder %v2941, 0.0
    %vm2944 = vcmp.ge.f32.partialorder %v2942, 0.0
    %v2945 = vmul.f32 %v2941, 0.2
    %v2946 = vmul.f32 %v2942, 0.2
    %v2947 = vsel %vm2943, %v2941, %v2945
    %v2948 = vsel %vm2944, %v2942, %v2946
    %v2949 = vpack.c.bf16 %v2947, %v2947
    %v2950 = vpack.c.bf16 %v2948, %v2948
    %v2951 = vld [vmem:[%s9] sm:$0xf]
    %v2952 = vld [vmem:[%s9 + $0x4] sm:$0xf]
    %v2953 = vld [vmem:[%s9 + $0x8] sm:$0xf]
    %v2954 = vld [vmem:[%s9 + $0xc] sm:$0xf]
    %v2955 = vld [vmem:[%s9 + $0x10] sm:$0xf]
    %v2956 = vld [vmem:[%s9 + $0x14] sm:$0xf]
    %v2957 = vld [vmem:[%s9 + $0x18] sm:$0xf]
    %v2958 = vld [vmem:[%s9 + $0x1c] sm:$0xf]
    %v2959 = vld [vmem:[%s9 + $0x20] sm:$0xf]
    %v2960 = vld [vmem:[%s9 + $0x24] sm:$0xf]
    %v2961 = vld [vmem:[%s9 + $0x28] sm:$0xf]
    %v2962 = vld [vmem:[%s9 + $0x2c] sm:$0xf]
    %v2963 = vld [vmem:[%s9 + $0x30] sm:$0xf]
    %v2964 = vld [vmem:[%s9 + $0x34] sm:$0xf]
    %v2965 = vld [vmem:[%s9 + $0x38] sm:$0xf]
    %v2966 = vld [vmem:[%s9 + $0x3c] sm:$0xf]
    %v2967 = vld [vmem:[%s9 + $0x40] sm:$0xf]
    %v2968 = vld [vmem:[%s9 + $0x44] sm:$0xf]
    %v2969 = vld [vmem:[%s9 + $0x48] sm:$0xf]
    %v2970 = vld [vmem:[%s9 + $0x4c] sm:$0xf]
    %v2971 = vld [vmem:[%s9 + $0x50] sm:$0xf]
    %v2972 = vld [vmem:[%s9 + $0x54] sm:$0xf]
    %v2973 = vld [vmem:[%s9 + $0x58] sm:$0xf]
    %v2974 = vld [vmem:[%s9 + $0x5c] sm:$0xf]
    %v2975 = vld [vmem:[%s9 + $0x60] sm:$0xf]
    %v2976 = vld [vmem:[%s9 + $0x64] sm:$0xf]
    %v2977 = vld [vmem:[%s9 + $0x68] sm:$0xf]
    %v2978 = vld [vmem:[%s9 + $0x6c] sm:$0xf]
    %v2979 = vld [vmem:[%s9 + $0x70] sm:$0xf]
    %v2980 = vld [vmem:[%s9 + $0x74] sm:$0xf]
    %v2981 = vld [vmem:[%s9 + $0x78] sm:$0xf]
    %v2982 = vld [vmem:[%s9 + $0x7c] sm:$0xf]
    %v2983 = vld [vmem:[%s10] sm:$0x1]
    %v2985 = vlaneseq
    %v2986 = vshrl.u32 %v2985, 7
    %v2987 = vsub.s32 0, %v2986
    %v2988 = vrot.slane %v2983, %v2987
    %v3022 = vunpack.c.l.b16 %v2951
    %v3023 = vunpack.c.l.b16 %v2952
    %v3024 = vunpack.c.l.b16 %v2953
    %v3025 = vunpack.c.l.b16 %v2954
    %v3026 = vunpack.c.l.b16 %v2955
    %v3027 = vunpack.c.l.b16 %v2956
    %v3028 = vunpack.c.l.b16 %v2957
    %v3029 = vunpack.c.l.b16 %v2958
    %v3030 = vunpack.c.l.b16 %v2959
    %v3031 = vunpack.c.l.b16 %v2960
    %v3032 = vunpack.c.l.b16 %v2961
    %v3033 = vunpack.c.l.b16 %v2962
    %v3034 = vunpack.c.l.b16 %v2963
    %v3035 = vunpack.c.l.b16 %v2964
    %v3036 = vunpack.c.l.b16 %v2965
    %v3037 = vunpack.c.l.b16 %v2966
    %v3038 = vunpack.c.l.b16 %v2967
    %v3039 = vunpack.c.l.b16 %v2968
    %v3040 = vunpack.c.l.b16 %v2969
    %v3041 = vunpack.c.l.b16 %v2970
    %v3042 = vunpack.c.l.b16 %v2971
    %v3043 = vunpack.c.l.b16 %v2972
    %v3044 = vunpack.c.l.b16 %v2973
    %v3045 = vunpack.c.l.b16 %v2974
    %v3046 = vunpack.c.l.b16 %v2975
    %v3047 = vunpack.c.l.b16 %v2976
    %v3048 = vunpack.c.l.b16 %v2977
    %v3049 = vunpack.c.l.b16 %v2978
    %v3050 = vunpack.c.l.b16 %v2979
    %v3051 = vunpack.c.l.b16 %v2980
    %v3052 = vunpack.c.l.b16 %v2981
    %v3053 = vunpack.c.l.b16 %v2982
    %v3054 = vpack.c.b16 %v3023, %v3022
    %v3055 = vpack.c.b16 %v3025, %v3024
    %v3056 = vpack.c.b16 %v3027, %v3026
    %v3057 = vpack.c.b16 %v3029, %v3028
    %v3058 = vpack.c.b16 %v3031, %v3030
    %v3059 = vpack.c.b16 %v3033, %v3032
    %v3060 = vpack.c.b16 %v3035, %v3034
    %v3061 = vpack.c.b16 %v3037, %v3036
    %v3062 = vpack.c.b16 %v3039, %v3038
    %v3063 = vpack.c.b16 %v3041, %v3040
    %v3064 = vpack.c.b16 %v3043, %v3042
    %v3065 = vpack.c.b16 %v3045, %v3044
    %v3066 = vpack.c.b16 %v3047, %v3046
    %v3067 = vpack.c.b16 %v3049, %v3048
    %v3068 = vpack.c.b16 %v3051, %v3050
    %v3069 = vpack.c.b16 %v3053, %v3052
    %3086 = vmatprep.subr.bf16.mxu0 0
    %3087 = vmatpush1.bf16.msra.mxu0 %v3054
    %3088 = vmatprep.subr.bf16.mxu0 0
    %3089 = vmatpush1.bf16.msra.mxu0 %v3055
    %3090 = vmatprep.subr.bf16.mxu0 0
    %3091 = vmatpush1.bf16.msra.mxu0 %v3056
    %3092 = vmatprep.subr.bf16.mxu0 0
    %3093 = vmatpush1.bf16.msra.mxu0 %v3057
    %3094 = vmatprep.subr.bf16.mxu0 0
    %3095 = vmatpush1.bf16.msra.mxu0 %v3058
    %3096 = vmatprep.subr.bf16.mxu0 0
    %3097 = vmatpush1.bf16.msra.mxu0 %v3059
    %3098 = vmatprep.subr.bf16.mxu0 0
    %3099 = vmatpush1.bf16.msra.mxu0 %v3060
    %3100 = vmatprep.subr.bf16.mxu0 0
    %3101 = vmatpush1.bf16.msra.mxu0 %v3061
    %3102 = vmatprep.subr.bf16.mxu0 0
    %3103 = vmatpush1.bf16.msra.mxu0 %v3062
    %3104 = vmatprep.subr.bf16.mxu0 0
    %3105 = vmatpush1.bf16.msra.mxu0 %v3063
    %3106 = vmatprep.subr.bf16.mxu0 0
    %3107 = vmatpush1.bf16.msra.mxu0 %v3064
    %3108 = vmatprep.subr.bf16.mxu0 0
    %3109 = vmatpush1.bf16.msra.mxu0 %v3065
    %3110 = vmatprep.subr.bf16.mxu0 0
    %3111 = vmatpush1.bf16.msra.mxu0 %v3066
    %3112 = vmatprep.subr.bf16.mxu0 0
    %3113 = vmatpush1.bf16.msra.mxu0 %v3067
    %3114 = vmatprep.subr.bf16.mxu0 0
    %3115 = vmatpush1.bf16.msra.mxu0 %v3068
    %3116 = vmatprep.subr.bf16.mxu0 0
    %3117 = vmatpush1.bf16.msra.mxu0 %v3069
    %3118 = vmatprep.mubr.bf16.mxu0 %v2950
    %3119 = vmatmul.mubr.bf16.gmra.mrb[0].mxu0 %v2949
    %v3120 = vpop.f32.mrb[0].mxu0
    %v3121 = vadd.f32 %v2988, %v3120
    %v3122 = vpop.f32.mrb[0].mxu0
    %v3123 = vpop.f32.mrb[0].mxu0
    %v3124 = vpop.f32.mrb[0].mxu0
    %3125 = vdwg.mxu0
    %v3126 = vand.u32 2147483647, %v3121
    %v3127 = vsub.f32 0.0, %v3126
    %v3128 = vmul.f32 %v3127, 1.442695
    %v3129 = vpow.pop %v3128
    %vm3130 = vcmp.ge.f32.partialorder %v3121, 0.0
    %v3131 = vsel %vm3130, 1.0, %v3129
    %v3132 = vadd.f32 %v3129, 1.0
    %v3133 = vrcp.pop %v3132
    %v3134 = vmul.f32 %v3131, %v3133
    %3135 = vst [vmem:[#allocation2] sm:$0x3] %v3134
    // Predicated region
    $region46: #{_lambda_.1} parent=1 // pred_check
      _
    $region47: #{_lambda_.1} parent=1 // pred_check_branch
      %3137 = sbr.rel (0) target = $region49
    $region48: #{_lambda_.1} parent=1 // pred_region
      %s3139 = ssub.s32 32, 32
      %3140 = vsyncadd [#allocation3], %s3139
      %s3142 = sshll.u32 [#allocation2], 4
      %s3143 = int_to_ptr.vmem [resolvable:$true] %s3142
      %3145 = dma.vmem_to_hbm [thread:$0]  %s3143, 32, %s11, [#allocation3]
    $region49: #{_lambda_.1} parent=1 // pred_fallthru
      _
    // Predicated region
    $region50: #{_lambda_.1} parent=1 // pred_check
      _
    $region51: #{_lambda_.1} parent=1 // pred_check_branch
      %3147 = sbr.rel (0) target = $region53
    $region52: #{_lambda_.1} parent=1 // pred_region
      %3148 = dma.done [#allocation3], 32
    $region53: #{_lambda_.1} parent=1 // pred_fallthru
      _
    %3149 = vsyncpa [#allocation3], 1

</llo_original>
